<compile_context>
chip_gen: v7x
topology: tpu7x:2x2x1
jax: 0.10.0
libtpu: 0.0.40
codegen_flags: <defaults>
</compile_context>

<pallas_src>
import math

import jax
import jax.numpy as jnp
from jax.experimental import pallas as pl
from jax.experimental.pallas import tpu as pltpu


# ---------------------------------------------------------------------------
# In-kernel helpers
# ---------------------------------------------------------------------------
def _layernorm(x, gamma, beta, eps=1e-12):
    mu = jnp.mean(x, axis=-1, keepdims=True)
    var = jnp.mean((x - mu) ** 2, axis=-1, keepdims=True)
    return (x - mu) * jax.lax.rsqrt(var + eps) * gamma + beta


# ---------------------------------------------------------------------------
# Fused kernel: BERT-style encoder layer + masked-mean-pool + L2 normalize.
# One grid step processes a block of `bb` batch items.
# ---------------------------------------------------------------------------
def encoder_layer_kernel(x_ref, mask_ref,
                         wqkv_ref, bqkv_ref, wo_ref, w1_ref, b1_ref, w2_ref,
                         vecs_ref,
                         out_ref, pooled_ref):
    bb, S, D = x_ref.shape
    x = x_ref[...].reshape(bb * S, D)                 # (bb*S, D) f32
    m = mask_ref[...]                                 # (bb, 1, S) f32 {0,1}

    # Packed (1, D) vectors: [bo, ln1_gamma, ln1_beta, b2, ln2_gamma, ln2_beta]
    vecs = vecs_ref[...]                              # (6, D) f32
    bo, g1, be1 = vecs[0:1], vecs[1:2], vecs[2:3]
    b2, g2, be2 = vecs[3:4], vecs[4:5], vecs[5:6]

    # --- fused QKV projection: one MXU launch, N = 3*D ----------------------
    x_bf = x.astype(jnp.bfloat16)
    qkv = jnp.dot(x_bf, wqkv_ref[...], preferred_element_type=jnp.float32)
    qkv = qkv + bqkv_ref[...]                          # (bb*S, 3D) f32
    q = qkv[:, 0 * D:1 * D].reshape(bb, S, D)
    k = qkv[:, 1 * D:2 * D].reshape(bb, S, D)
    v = qkv[:, 2 * D:3 * D].reshape(bb, S, D)

    # --- masked attention (softmax kept in f32) ------------------------------
    scale = 1.0 / math.sqrt(D)
    scores = jnp.einsum('bqd,bkd->bqk',
                        q.astype(jnp.bfloat16), k.astype(jnp.bfloat16),
                        preferred_element_type=jnp.float32) * scale
    key_valid = jnp.broadcast_to(m > 0.5, scores.shape)        # (bb, S, S) bool
    scores = jnp.where(key_valid, scores, jnp.float32(-1e9))
    scores = scores - jnp.max(scores, axis=-1, keepdims=True)
    p = jnp.exp(scores)
    attn = p * pl.reciprocal(jnp.sum(p, axis=-1, keepdims=True), approx=True)

    ctx = jnp.einsum('bqk,bkd->bqd',
                     attn.astype(jnp.bfloat16), v.astype(jnp.bfloat16),
                     preferred_element_type=jnp.float32)
    ctx = ctx.reshape(bb * S, D)

    attn_out = jnp.dot(ctx.astype(jnp.bfloat16), wo_ref[...],
                       preferred_element_type=jnp.float32) + bo
    h = _layernorm(x + attn_out, g1, be1)              # f32

    # --- feed-forward ---------------------------------------------------------
    ff = jnp.dot(h.astype(jnp.bfloat16), w1_ref[...],
                 preferred_element_type=jnp.float32) + b1_ref[...]
    # TODO(synk): HF BERT uses exact erf-GELU; tanh approximation used here (EUP-friendly).
    ff = jax.nn.gelu(ff, approximate=True)
    ff = jnp.dot(ff.astype(jnp.bfloat16), w2_ref[...],
                 preferred_element_type=jnp.float32) + b2
    out = _layernorm(h + ff, g2, be2)                  # (bb*S, D) f32

    out3 = out.reshape(bb, S, D)
    out_ref[...] = out3

    # --- fused masked-mean-pool + L2 normalize (forward_pooling) --------------
    # masked sum as (1,S)x(S,D) matmul per batch -> MXU instead of VPU+XLU reduce
    msum = jnp.einsum('bos,bsd->bod', m, out3,
                      preferred_element_type=jnp.float32)       # (bb, 1, D)
    denom = jnp.maximum(jnp.sum(m, axis=-1, keepdims=True), 1e-9)
    emb = msum / denom
    sumsq = jnp.sum(emb * emb, axis=-1, keepdims=True)
    # x / max(||x||, 1e-12)  ==  x * rsqrt(max(||x||^2, 1e-24))   (F.normalize semantics)
    pooled_ref[...] = emb * jax.lax.rsqrt(jnp.maximum(sumsq, 1e-24))


# ---------------------------------------------------------------------------
# Wrapper (glue: embedding lookup, specs, grid)
# ---------------------------------------------------------------------------
def text_to_emb_forward(token_ids, attention_mask, params, mean_pooling=False):
    B, S = token_ids.shape
    D = params["word_emb"].shape[-1]

    # Embedding lookup (glue, plain JAX gather — generalizes to real vocab sizes)
    x = (jnp.take(params["word_emb"], token_ids, axis=0)
         + params["pos_emb"][:S][None]).astype(jnp.float32)
    mask_f = attention_mask.astype(jnp.float32).reshape(B, 1, S)

    wqkv, bqkv = params["wqkv"], params["bqkv"]
    wo, w1, b1, w2 = params["wo"], params["w1"], params["b1"], params["w2"]
    vecs = params["vecs"]

    # Batch folded into at most 2 grid steps: amortizes per-step overhead while
    # still giving v7x's two TensorCores one "parallel" step each.
    if B >= 2 and B % 2 == 0:
        b_blk = B // 2
    else:
        b_blk = B
    nb = B // b_blk

    bmap = lambda i: (i, 0, 0)
    wmap = lambda i: (0, 0)

    in_specs = [
        pl.BlockSpec((b_blk, S, D), bmap),          # activations
        pl.BlockSpec((b_blk, 1, S), bmap),          # attention mask
        pl.BlockSpec(wqkv.shape, wmap),
        pl.BlockSpec(bqkv.shape, wmap),
        pl.BlockSpec(wo.shape, wmap),
        pl.BlockSpec(w1.shape, wmap),
        pl.BlockSpec(b1.shape, wmap),
        pl.BlockSpec(w2.shape, wmap),
        pl.BlockSpec(vecs.shape, wmap),
    ]
    out_specs = [
        pl.BlockSpec((b_blk, S, D), bmap),          # last_hidden_state
        pl.BlockSpec((b_blk, 1, D), bmap),          # pooled embedding
    ]

    last_hidden, pooled = pl.pallas_call(
        encoder_layer_kernel,
        out_shape=(jax.ShapeDtypeStruct((B, S, D), jnp.float32),
                   jax.ShapeDtypeStruct((B, 1, D), jnp.float32)),
        grid_spec=pltpu.PrefetchScalarGridSpec(
            num_scalar_prefetch=0,
            grid=(nb,),
            in_specs=in_specs,
            out_specs=out_specs,
        ),
        compiler_params=pltpu.CompilerParams(
            dimension_semantics=("parallel",)),
    )(x, mask_f, wqkv, bqkv, wo, w1, b1, w2, vecs)

    if mean_pooling:
        return pooled.reshape(B, D)

    length = jnp.sum(attention_mask.astype(bool), axis=1).astype(jnp.int32)
    return {"x": last_hidden, "length": length}


# ---------------------------------------------------------------------------
# Deterministic synthetic "pretrained" parameters (weights in bf16 for the MXU,
# biases / LayerNorm params in f32; packed to reduce operand count)
# ---------------------------------------------------------------------------
def init_params(key, vocab=100, max_seq=8, d=128, d_ff=256):
    ks = jax.random.split(key, 8)
    n = lambda k, shp: (jax.random.normal(k, shp, jnp.float32) * 0.02)
    wq, wk, wv = n(ks[2], (d, d)), n(ks[3], (d, d)), n(ks[4], (d, d))
    vecs = jnp.stack([
        jnp.zeros((d,), jnp.float32),   # bo
        jnp.ones((d,), jnp.float32),    # ln1 gamma
        jnp.zeros((d,), jnp.float32),   # ln1 beta
        jnp.zeros((d,), jnp.float32),   # b2
        jnp.ones((d,), jnp.float32),    # ln2 gamma
        jnp.zeros((d,), jnp.float32),   # ln2 beta
    ], axis=0)
    return {
        "word_emb": n(ks[0], (vocab, d)),
        "pos_emb":  n(ks[1], (max_seq, d)),
        "wqkv": jnp.concatenate([wq, wk, wv], axis=1).astype(jnp.bfloat16),
        "bqkv": jnp.zeros((1, 3 * d), jnp.float32),
        "wo":   n(ks[5], (d, d)).astype(jnp.bfloat16),
        "w1":   n(ks[6], (d, d_ff)).astype(jnp.bfloat16),
        "b1":   jnp.zeros((1, d_ff), jnp.float32),
        "w2":   n(ks[7], (d_ff, d)).astype(jnp.bfloat16),
        "vecs": vecs,
    }


if __name__ == "__main__":
    B, S, D, D_FF = 2, 8, 128, 256   # lane-dense hidden size (multiple of 128)
    key = jax.random.PRNGKey(0)
    kp, kt = jax.random.split(key)
    params = init_params(kp, vocab=100, max_seq=S, d=D, d_ff=D_FF)

    # Synthetic "tokenized" batch: token ids + padding mask (second sentence padded)
    token_ids = jax.random.randint(kt, (B, S), 0, 100, dtype=jnp.int32)
    attention_mask = jnp.array([[1] * 8, [1] * 5 + [0] * 3], dtype=jnp.int32)

    # forward(): {"x": last_hidden_state, "length": mask.sum(1)}
    out = text_to_emb_forward(token_ids, attention_mask, params, mean_pooling=False)
    jax.block_until_ready(out["x"])
    jax.block_until_ready(out["length"])
    assert out["x"].shape == (B, S, D) and out["length"].shape == (B,)
    assert bool(jnp.all(jnp.isfinite(out["x"])))
    assert out["length"].tolist() == [8, 5]

    # forward_pooling(): masked mean pooling + L2 normalize
    pooled = text_to_emb_forward(token_ids, attention_mask, params, mean_pooling=True)
    jax.block_until_ready(pooled)
    assert pooled.shape == (B, D)
    norms = jnp.sqrt(jnp.sum(pooled * pooled, axis=-1))
    assert bool(jnp.all(jnp.abs(norms - 1.0) < 1e-2))

    print("KERNEL_OK")
</pallas_src>

<mosaic_0001>
module attributes {stable_mosaic.version = 11 : i64} {
  func.func @encoder_layer_kernel(%arg0: i32, %arg1: memref<1x8x128xf32, #tpu.memory_space<vmem>>, %arg2: memref<1x1x8xf32, #tpu.memory_space<vmem>>, %arg3: memref<128x384xbf16, #tpu.memory_space<vmem>>, %arg4: memref<1x384xf32, #tpu.memory_space<vmem>>, %arg5: memref<128x128xbf16, #tpu.memory_space<vmem>>, %arg6: memref<128x256xbf16, #tpu.memory_space<vmem>>, %arg7: memref<1x256xf32, #tpu.memory_space<vmem>>, %arg8: memref<256x128xbf16, #tpu.memory_space<vmem>>, %arg9: memref<6x128xf32, #tpu.memory_space<vmem>>, %arg10: memref<1x8x128xf32, #tpu.memory_space<vmem>>, %arg11: memref<1x1x128xf32, #tpu.memory_space<vmem>>) attributes {dimension_semantics = [#tpu.dimension_semantics<parallel>], iteration_bounds = array<i64: 2>, scalar_prefetch = 0 : i64, scratch_operands = 0 : i64, tpu.core_type = #tpu.core_type<tc>, window_params = [{transform_indices = @transform_0, window_bounds = array<i64: 1, 8, 128>}, {transform_indices = @transform_1, window_bounds = array<i64: 1, 1, 8>}, {pipeline_mode = #tpu.pipeline_mode<synchronous>, transform_indices = @transform_2, window_bounds = array<i64: 128, 384>}, {pipeline_mode = #tpu.pipeline_mode<synchronous>, transform_indices = @transform_3, window_bounds = array<i64: 1, 384>}, {pipeline_mode = #tpu.pipeline_mode<synchronous>, transform_indices = @transform_4, window_bounds = array<i64: 128, 128>}, {pipeline_mode = #tpu.pipeline_mode<synchronous>, transform_indices = @transform_5, window_bounds = array<i64: 128, 256>}, {pipeline_mode = #tpu.pipeline_mode<synchronous>, transform_indices = @transform_6, window_bounds = array<i64: 1, 256>}, {pipeline_mode = #tpu.pipeline_mode<synchronous>, transform_indices = @transform_7, window_bounds = array<i64: 256, 128>}, {pipeline_mode = #tpu.pipeline_mode<synchronous>, transform_indices = @transform_8, window_bounds = array<i64: 6, 128>}, {transform_indices = @transform_9, window_bounds = array<i64: 1, 8, 128>}, {transform_indices = @transform_10, window_bounds = array<i64: 1, 1, 128>}]} {
    %c0 = arith.constant 0 : index
    %c0_0 = arith.constant 0 : index
    %c0_1 = arith.constant 0 : index
    %0 = vector.load %arg1[%c0, %c0_0, %c0_1] : memref<1x8x128xf32, #tpu.memory_space<vmem>>, vector<1x8x128xf32>
    %1 = vector.shape_cast %0 : vector<1x8x128xf32> to vector<8x128xf32>
    %c0_2 = arith.constant 0 : index
    %c0_3 = arith.constant 0 : index
    %c0_4 = arith.constant 0 : index
    %2 = vector.load %arg2[%c0_2, %c0_3, %c0_4] : memref<1x1x8xf32, #tpu.memory_space<vmem>>, vector<1x1x8xf32>
    %c0_5 = arith.constant 0 : index
    %c0_6 = arith.constant 0 : index
    %3 = vector.load %arg9[%c0_5, %c0_6] : memref<6x128xf32, #tpu.memory_space<vmem>>, vector<6x128xf32>
    %4 = vector.extract_strided_slice %3 {offsets = [0, 0], sizes = [1, 128], strides = [1, 1]} : vector<6x128xf32> to vector<1x128xf32>
    %5 = vector.extract_strided_slice %3 {offsets = [1, 0], sizes = [1, 128], strides = [1, 1]} : vector<6x128xf32> to vector<1x128xf32>
    %6 = vector.extract_strided_slice %3 {offsets = [2, 0], sizes = [1, 128], strides = [1, 1]} : vector<6x128xf32> to vector<1x128xf32>
    %7 = vector.extract_strided_slice %3 {offsets = [3, 0], sizes = [1, 128], strides = [1, 1]} : vector<6x128xf32> to vector<1x128xf32>
    %8 = vector.extract_strided_slice %3 {offsets = [4, 0], sizes = [1, 128], strides = [1, 1]} : vector<6x128xf32> to vector<1x128xf32>
    %9 = vector.extract_strided_slice %3 {offsets = [5, 0], sizes = [1, 128], strides = [1, 1]} : vector<6x128xf32> to vector<1x128xf32>
    %10 = arith.truncf %1 : vector<8x128xf32> to vector<8x128xbf16>
    %c0_7 = arith.constant 0 : index
    %c0_8 = arith.constant 0 : index
    %11 = vector.load %arg3[%c0_7, %c0_8] : memref<128x384xbf16, #tpu.memory_space<vmem>>, vector<128x384xbf16>
    %cst = arith.constant dense<0.000000e+00> : vector<8x384xf32>
    %12 = tpu.matmul %10, %11, %cst {dimension_numbers = #tpu.dot_dimension_numbers<[1], [0], [0], [1], [0, 0, 1, 1], [], []>} : vector<8x128xbf16>, vector<128x384xbf16>, vector<8x384xf32> -> vector<8x384xf32>
    %c0_9 = arith.constant 0 : index
    %c0_10 = arith.constant 0 : index
    %13 = vector.load %arg4[%c0_9, %c0_10] : memref<1x384xf32, #tpu.memory_space<vmem>>, vector<1x384xf32>
    %14 = vector.broadcast %13 : vector<1x384xf32> to vector<8x384xf32>
    %15 = arith.addf %12, %14 : vector<8x384xf32>
    %16 = vector.extract_strided_slice %15 {offsets = [0, 0], sizes = [8, 128], strides = [1, 1]} : vector<8x384xf32> to vector<8x128xf32>
    %17 = vector.shape_cast %16 : vector<8x128xf32> to vector<1x8x128xf32>
    %18 = vector.extract_strided_slice %15 {offsets = [0, 128], sizes = [8, 128], strides = [1, 1]} : vector<8x384xf32> to vector<8x128xf32>
    %19 = vector.shape_cast %18 : vector<8x128xf32> to vector<1x8x128xf32>
    %20 = vector.extract_strided_slice %15 {offsets = [0, 256], sizes = [8, 128], strides = [1, 1]} : vector<8x384xf32> to vector<8x128xf32>
    %21 = vector.shape_cast %20 : vector<8x128xf32> to vector<1x8x128xf32>
    %22 = arith.truncf %17 : vector<1x8x128xf32> to vector<1x8x128xbf16>
    %23 = arith.truncf %19 : vector<1x8x128xf32> to vector<1x8x128xbf16>
    "tpu.trace_start"() <{level = 10 : i32, message = "bqd,bkd->bqk"}> : () -> ()
    %cst_11 = arith.constant dense<0.000000e+00> : vector<1x8x8xf32>
    %24 = tpu.matmul %22, %23, %cst_11 {dimension_numbers = #tpu.dot_dimension_numbers<[2], [2], [1], [1], [0, 0, 0, 1, 1, 1], [0], [0]>} : vector<1x8x128xbf16>, vector<1x8x128xbf16>, vector<1x8x8xf32> -> vector<1x8x8xf32>
    "tpu.trace_stop"() : () -> ()
    %cst_12 = arith.constant 0.0883883461 : f32
    %25 = vector.broadcast %cst_12 : f32 to vector<1x8x8xf32>
    %26 = arith.mulf %24, %25 : vector<1x8x8xf32>
    %cst_13 = arith.constant 5.000000e-01 : f32
    %27 = vector.broadcast %cst_13 : f32 to vector<1x1x8xf32>
    %28 = arith.cmpf ogt, %2, %27 : vector<1x1x8xf32>
    %29 = vector.shape_cast %28 : vector<1x1x8xi1> to vector<1x1x8xi1>
    %30 = vector.broadcast %29 : vector<1x1x8xi1> to vector<1x8x8xi1>
    %cst_14 = arith.constant -1.000000e+09 : f32
    %31 = vector.broadcast %cst_14 : f32 to vector<1x8x8xf32>
    %32 = arith.select %30, %26, %31 : vector<1x8x8xi1>, vector<1x8x8xf32>
    %cst_15 = arith.constant dense<0xFF800000> : vector<1x8xf32>
    %33 = vector.multi_reduction <maximumf>, %32, %cst_15 [2] : vector<1x8x8xf32> to vector<1x8xf32>
    %34 = vector.shape_cast %33 : vector<1x8xf32> to vector<1x8x1xf32>
    %35 = vector.broadcast %34 : vector<1x8x1xf32> to vector<1x8x8xf32>
    %36 = arith.subf %32, %35 : vector<1x8x8xf32>
    %37 = math.exp %36 : vector<1x8x8xf32>
    %cst_16 = arith.constant dense<0.000000e+00> : vector<1x8xf32>
    %38 = vector.multi_reduction <add>, %37, %cst_16 [2] : vector<1x8x8xf32> to vector<1x8xf32>
    %39 = vector.shape_cast %38 : vector<1x8xf32> to vector<1x8x1xf32>
    %40 = tpu.reciprocal %39 {approx = true} : vector<1x8x1xf32> -> vector<1x8x1xf32>
    %41 = vector.broadcast %40 : vector<1x8x1xf32> to vector<1x8x8xf32>
    %42 = arith.mulf %37, %41 : vector<1x8x8xf32>
    %43 = arith.truncf %42 : vector<1x8x8xf32> to vector<1x8x8xbf16>
    %44 = arith.truncf %21 : vector<1x8x128xf32> to vector<1x8x128xbf16>
    "tpu.trace_start"() <{level = 10 : i32, message = "bqk,bkd->bqd"}> : () -> ()
    %cst_17 = arith.constant dense<0.000000e+00> : vector<1x8x128xf32>
    %45 = tpu.matmul %43, %44, %cst_17 {dimension_numbers = #tpu.dot_dimension_numbers<[2], [1], [1], [2], [0, 0, 0, 1, 1, 2], [0], [0]>} : vector<1x8x8xbf16>, vector<1x8x128xbf16>, vector<1x8x128xf32> -> vector<1x8x128xf32>
    "tpu.trace_stop"() : () -> ()
    %46 = vector.shape_cast %45 : vector<1x8x128xf32> to vector<8x128xf32>
    %47 = arith.truncf %46 : vector<8x128xf32> to vector<8x128xbf16>
    %c0_18 = arith.constant 0 : index
    %c0_19 = arith.constant 0 : index
    %48 = vector.load %arg5[%c0_18, %c0_19] : memref<128x128xbf16, #tpu.memory_space<vmem>>, vector<128x128xbf16>
    %cst_20 = arith.constant dense<0.000000e+00> : vector<8x128xf32>
    %49 = tpu.matmul %47, %48, %cst_20 {dimension_numbers = #tpu.dot_dimension_numbers<[1], [0], [0], [1], [0, 0, 1, 1], [], []>} : vector<8x128xbf16>, vector<128x128xbf16>, vector<8x128xf32> -> vector<8x128xf32>
    %50 = vector.broadcast %4 : vector<1x128xf32> to vector<8x128xf32>
    %51 = arith.addf %49, %50 : vector<8x128xf32>
    %52 = arith.addf %1, %51 : vector<8x128xf32>
    %cst_21 = arith.constant dense<0.000000e+00> : vector<8xf32>
    %53 = vector.multi_reduction <add>, %52, %cst_21 [1] : vector<8x128xf32> to vector<8xf32>
    %54 = vector.shape_cast %53 : vector<8xf32> to vector<8x1xf32>
    %cst_22 = arith.constant 1.280000e+02 : f32
    %55 = vector.broadcast %cst_22 : f32 to vector<8x1xf32>
    %56 = arith.divf %54, %55 : vector<8x1xf32>
    %57 = vector.broadcast %56 : vector<8x1xf32> to vector<8x128xf32>
    %58 = arith.subf %52, %57 : vector<8x128xf32>
    %59 = arith.mulf %58, %58 : vector<8x128xf32>
    %cst_23 = arith.constant dense<0.000000e+00> : vector<8xf32>
    %60 = vector.multi_reduction <add>, %59, %cst_23 [1] : vector<8x128xf32> to vector<8xf32>
    %61 = vector.shape_cast %60 : vector<8xf32> to vector<8x1xf32>
    %cst_24 = arith.constant 1.280000e+02 : f32
    %62 = vector.broadcast %cst_24 : f32 to vector<8x1xf32>
    %63 = arith.divf %61, %62 : vector<8x1xf32>
    %64 = vector.broadcast %56 : vector<8x1xf32> to vector<8x128xf32>
    %65 = arith.subf %52, %64 : vector<8x128xf32>
    %cst_25 = arith.constant 9.99999996E-13 : f32
    %66 = vector.broadcast %cst_25 : f32 to vector<8x1xf32>
    %67 = arith.addf %63, %66 : vector<8x1xf32>
    %68 = math.rsqrt %67 : vector<8x1xf32>
    %69 = vector.broadcast %68 : vector<8x1xf32> to vector<8x128xf32>
    %70 = arith.mulf %65, %69 : vector<8x128xf32>
    %71 = vector.broadcast %5 : vector<1x128xf32> to vector<8x128xf32>
    %72 = arith.mulf %70, %71 : vector<8x128xf32>
    %73 = vector.broadcast %6 : vector<1x128xf32> to vector<8x128xf32>
    %74 = arith.addf %72, %73 : vector<8x128xf32>
    %75 = arith.truncf %74 : vector<8x128xf32> to vector<8x128xbf16>
    %c0_26 = arith.constant 0 : index
    %c0_27 = arith.constant 0 : index
    %76 = vector.load %arg6[%c0_26, %c0_27] : memref<128x256xbf16, #tpu.memory_space<vmem>>, vector<128x256xbf16>
    %cst_28 = arith.constant dense<0.000000e+00> : vector<8x256xf32>
    %77 = tpu.matmul %75, %76, %cst_28 {dimension_numbers = #tpu.dot_dimension_numbers<[1], [0], [0], [1], [0, 0, 1, 1], [], []>} : vector<8x128xbf16>, vector<128x256xbf16>, vector<8x256xf32> -> vector<8x256xf32>
    %c0_29 = arith.constant 0 : index
    %c0_30 = arith.constant 0 : index
    %78 = vector.load %arg7[%c0_29, %c0_30] : memref<1x256xf32, #tpu.memory_space<vmem>>, vector<1x256xf32>
    %79 = vector.broadcast %78 : vector<1x256xf32> to vector<8x256xf32>
    %80 = arith.addf %77, %79 : vector<8x256xf32>
    %81 = arith.mulf %80, %80 : vector<8x256xf32>
    %82 = arith.mulf %80, %81 : vector<8x256xf32>
    %cst_31 = arith.constant 4.471500e-02 : f32
    %83 = vector.broadcast %cst_31 : f32 to vector<8x256xf32>
    %84 = arith.mulf %83, %82 : vector<8x256xf32>
    %85 = arith.addf %80, %84 : vector<8x256xf32>
    %cst_32 = arith.constant 0.797884583 : f32
    %86 = vector.broadcast %cst_32 : f32 to vector<8x256xf32>
    %87 = arith.mulf %86, %85 : vector<8x256xf32>
    %88 = math.tanh %87 : vector<8x256xf32>
    %cst_33 = arith.constant 1.000000e+00 : f32
    %89 = vector.broadcast %cst_33 : f32 to vector<8x256xf32>
    %90 = arith.addf %89, %88 : vector<8x256xf32>
    %cst_34 = arith.constant 5.000000e-01 : f32
    %91 = vector.broadcast %cst_34 : f32 to vector<8x256xf32>
    %92 = arith.mulf %91, %90 : vector<8x256xf32>
    %93 = arith.mulf %80, %92 : vector<8x256xf32>
    %94 = arith.truncf %93 : vector<8x256xf32> to vector<8x256xbf16>
    %c0_35 = arith.constant 0 : index
    %c0_36 = arith.constant 0 : index
    %95 = vector.load %arg8[%c0_35, %c0_36] : memref<256x128xbf16, #tpu.memory_space<vmem>>, vector<256x128xbf16>
    %cst_37 = arith.constant dense<0.000000e+00> : vector<8x128xf32>
    %96 = tpu.matmul %94, %95, %cst_37 {dimension_numbers = #tpu.dot_dimension_numbers<[1], [0], [0], [1], [0, 0, 1, 1], [], []>} : vector<8x256xbf16>, vector<256x128xbf16>, vector<8x128xf32> -> vector<8x128xf32>
    %97 = vector.broadcast %7 : vector<1x128xf32> to vector<8x128xf32>
    %98 = arith.addf %96, %97 : vector<8x128xf32>
    %99 = arith.addf %74, %98 : vector<8x128xf32>
    %cst_38 = arith.constant dense<0.000000e+00> : vector<8xf32>
    %100 = vector.multi_reduction <add>, %99, %cst_38 [1] : vector<8x128xf32> to vector<8xf32>
    %101 = vector.shape_cast %100 : vector<8xf32> to vector<8x1xf32>
    %cst_39 = arith.constant 1.280000e+02 : f32
    %102 = vector.broadcast %cst_39 : f32 to vector<8x1xf32>
    %103 = arith.divf %101, %102 : vector<8x1xf32>
    %104 = vector.broadcast %103 : vector<8x1xf32> to vector<8x128xf32>
    %105 = arith.subf %99, %104 : vector<8x128xf32>
    %106 = arith.mulf %105, %105 : vector<8x128xf32>
    %cst_40 = arith.constant dense<0.000000e+00> : vector<8xf32>
    %107 = vector.multi_reduction <add>, %106, %cst_40 [1] : vector<8x128xf32> to vector<8xf32>
    %108 = vector.shape_cast %107 : vector<8xf32> to vector<8x1xf32>
    %cst_41 = arith.constant 1.280000e+02 : f32
    %109 = vector.broadcast %cst_41 : f32 to vector<8x1xf32>
    %110 = arith.divf %108, %109 : vector<8x1xf32>
    %111 = vector.broadcast %103 : vector<8x1xf32> to vector<8x128xf32>
    %112 = arith.subf %99, %111 : vector<8x128xf32>
    %cst_42 = arith.constant 9.99999996E-13 : f32
    %113 = vector.broadcast %cst_42 : f32 to vector<8x1xf32>
    %114 = arith.addf %110, %113 : vector<8x1xf32>
    %115 = math.rsqrt %114 : vector<8x1xf32>
    %116 = vector.broadcast %115 : vector<8x1xf32> to vector<8x128xf32>
    %117 = arith.mulf %112, %116 : vector<8x128xf32>
    %118 = vector.broadcast %8 : vector<1x128xf32> to vector<8x128xf32>
    %119 = arith.mulf %117, %118 : vector<8x128xf32>
    %120 = vector.broadcast %9 : vector<1x128xf32> to vector<8x128xf32>
    %121 = arith.addf %119, %120 : vector<8x128xf32>
    %122 = vector.shape_cast %121 : vector<8x128xf32> to vector<1x8x128xf32>
    %c0_43 = arith.constant 0 : index
    %c0_44 = arith.constant 0 : index
    %c0_45 = arith.constant 0 : index
    %123 = vector.load %arg10[%c0_43, %c0_44, %c0_45] : memref<1x8x128xf32, #tpu.memory_space<vmem>>, vector<1x8x128xf32>
    tpu.vector_store %arg10[%c0_43, %c0_44, %c0_45], %122 {strides = array<i32>} : memref<1x8x128xf32, #tpu.memory_space<vmem>>, vector<1x8x128xf32>,
    "tpu.trace_start"() <{level = 10 : i32, message = "bos,bsd->bod"}> : () -> ()
    %cst_46 = arith.constant dense<0.000000e+00> : vector<1x1x128xf32>
    %124 = tpu.matmul %2, %122, %cst_46 {dimension_numbers = #tpu.dot_dimension_numbers<[2], [1], [1], [2], [0, 0, 0, 1, 1, 2], [0], [0]>} : vector<1x1x8xf32>, vector<1x8x128xf32>, vector<1x1x128xf32> -> vector<1x1x128xf32>
    "tpu.trace_stop"() : () -> ()
    %cst_47 = arith.constant dense<0.000000e+00> : vector<1x1xf32>
    %125 = vector.multi_reduction <add>, %2, %cst_47 [2] : vector<1x1x8xf32> to vector<1x1xf32>
    %126 = vector.shape_cast %125 : vector<1x1xf32> to vector<1x1x1xf32>
    %cst_48 = arith.constant 9.99999971E-10 : f32
    %127 = vector.broadcast %cst_48 : f32 to vector<1x1x1xf32>
    %128 = arith.maximumf %126, %127 : vector<1x1x1xf32>
    %129 = vector.broadcast %128 : vector<1x1x1xf32> to vector<1x1x128xf32>
    %130 = arith.divf %124, %129 : vector<1x1x128xf32>
    %131 = arith.mulf %130, %130 : vector<1x1x128xf32>
    %cst_49 = arith.constant dense<0.000000e+00> : vector<1x1xf32>
    %132 = vector.multi_reduction <add>, %131, %cst_49 [2] : vector<1x1x128xf32> to vector<1x1xf32>
    %133 = vector.shape_cast %132 : vector<1x1xf32> to vector<1x1x1xf32>
    %cst_50 = arith.constant 1.000000e-24 : f32
    %134 = vector.broadcast %cst_50 : f32 to vector<1x1x1xf32>
    %135 = arith.maximumf %133, %134 : vector<1x1x1xf32>
    %136 = math.rsqrt %135 : vector<1x1x1xf32>
    %137 = vector.broadcast %136 : vector<1x1x1xf32> to vector<1x1x128xf32>
    %138 = arith.mulf %130, %137 : vector<1x1x128xf32>
    %c0_51 = arith.constant 0 : index
    %c0_52 = arith.constant 0 : index
    %c0_53 = arith.constant 0 : index
    %139 = vector.load %arg11[%c0_51, %c0_52, %c0_53] : memref<1x1x128xf32, #tpu.memory_space<vmem>>, vector<1x1x128xf32>
    tpu.vector_store %arg11[%c0_51, %c0_52, %c0_53], %138 {strides = array<i32>} : memref<1x1x128xf32, #tpu.memory_space<vmem>>, vector<1x1x128xf32>,
    return
  }
  func.func @transform_0(%arg0: i32) -> (i32, i32, i32) {
    %c0_i32 = arith.constant 0 : i32
    %c0_i32_0 = arith.constant 0 : i32
    %c0_i32_1 = arith.constant 0 : i32
    return %arg0, %c0_i32, %c0_i32_0 : i32, i32, i32
  }
  func.func @transform_1(%arg0: i32) -> (i32, i32, i32) {
    %c0_i32 = arith.constant 0 : i32
    %c0_i32_0 = arith.constant 0 : i32
    %c0_i32_1 = arith.constant 0 : i32
    return %arg0, %c0_i32, %c0_i32_0 : i32, i32, i32
  }
  func.func @transform_2(%arg0: i32) -> (i32, i32) {
    %c0_i32 = arith.constant 0 : i32
    %c0_i32_0 = arith.constant 0 : i32
    %c0_i32_1 = arith.constant 0 : i32
    return %c0_i32, %c0_i32_0 : i32, i32
  }
  func.func @transform_3(%arg0: i32) -> (i32, i32) {
    %c0_i32 = arith.constant 0 : i32
    %c0_i32_0 = arith.constant 0 : i32
    %c0_i32_1 = arith.constant 0 : i32
    return %c0_i32, %c0_i32_0 : i32, i32
  }
  func.func @transform_4(%arg0: i32) -> (i32, i32) {
    %c0_i32 = arith.constant 0 : i32
    %c0_i32_0 = arith.constant 0 : i32
    %c0_i32_1 = arith.constant 0 : i32
    return %c0_i32, %c0_i32_0 : i32, i32
  }
  func.func @transform_5(%arg0: i32) -> (i32, i32) {
    %c0_i32 = arith.constant 0 : i32
    %c0_i32_0 = arith.constant 0 : i32
    %c0_i32_1 = arith.constant 0 : i32
    return %c0_i32, %c0_i32_0 : i32, i32
  }
  func.func @transform_6(%arg0: i32) -> (i32, i32) {
    %c0_i32 = arith.constant 0 : i32
    %c0_i32_0 = arith.constant 0 : i32
    %c0_i32_1 = arith.constant 0 : i32
    return %c0_i32, %c0_i32_0 : i32, i32
  }
  func.func @transform_7(%arg0: i32) -> (i32, i32) {
    %c0_i32 = arith.constant 0 : i32
    %c0_i32_0 = arith.constant 0 : i32
    %c0_i32_1 = arith.constant 0 : i32
    return %c0_i32, %c0_i32_0 : i32, i32
  }
  func.func @transform_8(%arg0: i32) -> (i32, i32) {
    %c0_i32 = arith.constant 0 : i32
    %c0_i32_0 = arith.constant 0 : i32
    %c0_i32_1 = arith.constant 0 : i32
    return %c0_i32, %c0_i32_0 : i32, i32
  }
  func.func @transform_9(%arg0: i32) -> (i32, i32, i32) {
    %c0_i32 = arith.constant 0 : i32
    %c0_i32_0 = arith.constant 0 : i32
    %c0_i32_1 = arith.constant 0 : i32
    return %arg0, %c0_i32, %c0_i32_0 : i32, i32, i32
  }
  func.func @transform_10(%arg0: i32) -> (i32, i32, i32) {
    %c0_i32 = arith.constant 0 : i32
    %c0_i32_0 = arith.constant 0 : i32
    %c0_i32_1 = arith.constant 0 : i32
    return %arg0, %c0_i32, %c0_i32_0 : i32, i32, i32
  }
}

</mosaic_0001>

<llo_original>
// kernel: tpu_custom_call.1
$region0: #{tpu_custom_call.1}
  #allocation0 [shape = 'u32[]', space=smem, size = 0x4, offset = 0x4, fixed_abs, tag = 'smem constant byte address 0x4 - core index']
  #allocation1 [shape = 'u32[144,128]{1,0:T(1,128)}', space=vmem, size = 0x12000, scoped, tag = 'internal scratch']
  %s0 = inlined_call_operand.hbm [shape: f32[2,8,128], index: 0, kind: input, shape index: {}]
  %s1 = inlined_call_operand.vmem [shape: f32[2,1,8], index: 1, kind: input, shape index: {}]
  %s2 = inlined_call_operand.hbm [shape: bf16[128,384], index: 2, kind: input, shape index: {}]
  %s3 = inlined_call_operand.vmem [shape: f32[1,384], index: 3, kind: input, shape index: {}]
  %s4 = inlined_call_operand.hbm [shape: bf16[128,128], index: 4, kind: input, shape index: {}]
  %s5 = inlined_call_operand.hbm [shape: bf16[128,256], index: 5, kind: input, shape index: {}]
  %s6 = inlined_call_operand.vmem [shape: f32[1,256], index: 6, kind: input, shape index: {}]
  %s7 = inlined_call_operand.hbm [shape: bf16[256,128], index: 7, kind: input, shape index: {}]
  %s8 = inlined_call_operand.vmem [shape: f32[6,128], index: 8, kind: input, shape index: {}]
  %s9 = inlined_call_operand.hbm [shape: f32[2,8,128], index: 9, kind: output, shape index: {0}]
  %s10 = inlined_call_operand.hbm [shape: f32[2,1,128], index: 10, kind: output, shape index: {1}]
  %11 = xla_tuple %s9, %s10
  %s12 = sld [smem:[#allocation0]]
  $region97: #{tpu_custom_call.1} parent=0
    _
  %s14 = ssub.s32 1, %s12
  %s15 = scalar_select 0, %s14, %s12
  $region1: #{tpu_custom_call.1} parent=0
    #allocation2 [shape = 'u8[8192]{0}', space=vmem, size = 0x2000, scoped, tag = 'input window, operand 0']
    #allocation3 [shape = 's32[2]{0}', space=sflag, size = 0x8, scoped, tag = 'scoped memory for tpu_custom_call.1']
    #allocation4 [shape = 's32[2]{0}', space=sflag, size = 0x8, scoped, tag = 'scoped memory for tpu_custom_call.1']
    #allocation5 [shape = 'u8[98304]{0}', space=vmem, size = 0x18000, scoped, tag = 'input window, operand 2, single buffered']
    #allocation6 [shape = 's32[1]{0}', space=sflag, size = 0x4, scoped, tag = 'scoped memory for tpu_custom_call.1']
    #allocation7 [shape = 'u8[32768]{0}', space=vmem, size = 0x8000, scoped, tag = 'input window, operand 4, single buffered']
    #allocation8 [shape = 'u8[65536]{0}', space=vmem, size = 0x10000, scoped, tag = 'input window, operand 5, single buffered']
    #allocation9 [shape = 's32[1]{0}', space=sflag, size = 0x4, scoped, tag = 'scoped memory for tpu_custom_call.1']
    #allocation10 [shape = 'u8[65536]{0}', space=vmem, size = 0x10000, scoped, tag = 'input window, operand 7, single buffered']
    #allocation11 [shape = 'u8[8192]{0}', space=vmem, size = 0x2000, scoped, tag = 'output window, operand 0']
    #allocation12 [shape = 'u8[1024]{0}', space=vmem, size = 0x400, scoped, tag = 'output window, operand 1']
    #allocation13 [shape = 's32[2]{0}', space=sflag, size = 0x8, scoped, tag = 'scoped memory for tpu_custom_call.1']
    %16 = vsyncpa [#allocation3], 0
    %s17 = scalar_lea.sflag [#allocation3], 1
    %18 = vsyncpa %s17, 0
    %19 = vsyncpa [#allocation6], 0
    %20 = vsyncpa [#allocation9], 0
    %21 = vsyncpa [#allocation4], 0
    %s22 = scalar_lea.sflag [#allocation4], 1
    %23 = vsyncpa %s22, 0
    %24 = vsyncpa [#allocation13], 0
    %s25 = scalar_lea.sflag [#allocation13], 1
    %26 = vsyncpa %s25, 0
    loop: start=0, step=1, limit=4
    $region2: #{tpu_custom_call.1} parent=1 // loop_pre_header
      _
    $region3: #{tpu_custom_call.1} parent=1 // loop_header
      %s28 = sphi 0, %s32
      %p29 = scmp.ge.s32.totalorder %s28, 4
      %s38 = sphi 0, %s40
      %s41 = sphi 0, %s38
      %s42 = sphi 0, %s41
      %s58 = sphi 0, %s42
      %s64 = sphi 0, %s66
      %s67 = sphi 0, %s64
      %s68 = sphi 0, %s67
      %s84 = sphi 0, %s68
      %s88 = sphi 0, %s88
      %s90 = sphi 0, %s88
      %s91 = sphi 0, %s90
      %s105 = sphi 0, %s91
      %s109 = sphi 0, %s109
      %s111 = sphi 0, %s109
      %s112 = sphi 0, %s111
      %s126 = sphi 0, %s112
      %s130 = sphi 0, %s130
      %s132 = sphi 0, %s130
      %s133 = sphi 0, %s132
      %s147 = sphi 0, %s133
      %s151 = sphi 0, %s151
      %s153 = sphi 0, %s151
      %s154 = sphi 0, %s153
      %s168 = sphi 0, %s154
      %s172 = sphi 0, %s172
      %s174 = sphi 0, %s172
      %s175 = sphi 0, %s174
      %s189 = sphi 0, %s175
      %s193 = sphi 0, %s193
      %s195 = sphi 0, %s193
      %s196 = sphi 0, %s195
      %s210 = sphi 0, %s196
      %s214 = sphi 0, %s214
      %s216 = sphi 0, %s214
      %s217 = sphi 0, %s216
      %s231 = sphi 0, %s217
      %s237 = sphi 0, %s239
      %s240 = sphi 0, %s237
      %s241 = sphi 0, %s240
      %s257 = sphi 0, %s241
      %s263 = sphi 0, %s265
      %s266 = sphi 0, %s263
      %s267 = sphi 0, %s266
      %s283 = sphi 0, %s267
    $region4: #{tpu_custom_call.1} parent=1 // loop_header_branch
      %31 = sbr.rel (%p29) target = $region8
    $region5: #{tpu_custom_call.1} parent=1 // loop_body
      %s33 = ssub.s32 %s28, 1
      %s34 = ssub.s32 %s28, 2
      %s35 = sadd.s32 %s28, 1
      %s36 = ssub.s32 %s28, %s35
      %p37 = scmp.eq.s32.totalorder %s36, 0
      %s39 = sadd.s32 %s38, 1
      %s40 = scalar_select %p37, %s38, %s39
      %p43 = pneg %p37
      %p44 = scmp.eq.s32.totalorder %s28, 1
      %p45 = por %p43, %p44
      %p46 = scmp.ne.s32.totalorder %s38, %s41
      %p47 = scmp.eq.s32.totalorder %s28, 0
      %p48 = por %p46, %p47
      %p49 = scmp.ne.s32.totalorder %s38, %s41
      %p50 = scmp.eq.s32.totalorder %s33, 1
      %p51 = por %p49, %p50
      %p52 = scmp.ne.s32.totalorder %s41, %s42
      %p53 = scmp.eq.s32.totalorder %s33, 0
      %p54 = por %p52, %p53
      %p55 = scmp.ne.s32.totalorder %s41, %s42
      %p56 = scmp.eq.s32.totalorder %s34, 1
      %p57 = por %p55, %p56
      %p59 = scmp.ne.s32.totalorder %s42, %s58
      %p60 = scmp.eq.s32.totalorder %s34, 0
      %p61 = por %p59, %p60
      %s62 = ssub.s32 %s28, %s35
      %p63 = scmp.eq.s32.totalorder %s62, 0
      %s65 = sadd.s32 %s64, 1
      %s66 = scalar_select %p63, %s64, %s65
      %p69 = pneg %p63
      %p70 = scmp.eq.s32.totalorder %s28, 1
      %p71 = por %p69, %p70
      %p72 = scmp.ne.s32.totalorder %s64, %s67
      %p73 = scmp.eq.s32.totalorder %s28, 0
      %p74 = por %p72, %p73
      %p75 = scmp.ne.s32.totalorder %s64, %s67
      %p76 = scmp.eq.s32.totalorder %s33, 1
      %p77 = por %p75, %p76
      %p78 = scmp.ne.s32.totalorder %s67, %s68
      %p79 = scmp.eq.s32.totalorder %s33, 0
      %p80 = por %p78, %p79
      %p81 = scmp.ne.s32.totalorder %s67, %s68
      %p82 = scmp.eq.s32.totalorder %s34, 1
      %p83 = por %p81, %p82
      %p85 = scmp.ne.s32.totalorder %s68, %s84
      %p86 = scmp.eq.s32.totalorder %s34, 0
      %p87 = por %p85, %p86
      %s89 = sadd.s32 %s88, 1
      %p92 = scmp.eq.s32.totalorder %s28, 1
      %p93 = scmp.ne.s32.totalorder %s88, %s90
      %p94 = scmp.eq.s32.totalorder %s28, 0
      %p95 = por %p93, %p94
      %p96 = scmp.ne.s32.totalorder %s88, %s90
      %p97 = scmp.eq.s32.totalorder %s33, 1
      %p98 = por %p96, %p97
      %p99 = scmp.ne.s32.totalorder %s90, %s91
      %p100 = scmp.eq.s32.totalorder %s33, 0
      %p101 = por %p99, %p100
      %p102 = scmp.ne.s32.totalorder %s90, %s91
      %p103 = scmp.eq.s32.totalorder %s34, 1
      %p104 = por %p102, %p103
      %p106 = scmp.ne.s32.totalorder %s91, %s105
      %p107 = scmp.eq.s32.totalorder %s34, 0
      %p108 = por %p106, %p107
      %s110 = sadd.s32 %s109, 1
      %p113 = scmp.eq.s32.totalorder %s28, 1
      %p114 = scmp.ne.s32.totalorder %s109, %s111
      %p115 = scmp.eq.s32.totalorder %s28, 0
      %p116 = por %p114, %p115
      %p117 = scmp.ne.s32.totalorder %s109, %s111
      %p118 = scmp.eq.s32.totalorder %s33, 1
      %p119 = por %p117, %p118
      %p120 = scmp.ne.s32.totalorder %s111, %s112
      %p121 = scmp.eq.s32.totalorder %s33, 0
      %p122 = por %p120, %p121
      %p123 = scmp.ne.s32.totalorder %s111, %s112
      %p124 = scmp.eq.s32.totalorder %s34, 1
      %p125 = por %p123, %p124
      %p127 = scmp.ne.s32.totalorder %s112, %s126
      %p128 = scmp.eq.s32.totalorder %s34, 0
      %p129 = por %p127, %p128
      %s131 = sadd.s32 %s130, 1
      %p134 = scmp.eq.s32.totalorder %s28, 1
      %p135 = scmp.ne.s32.totalorder %s130, %s132
      %p136 = scmp.eq.s32.totalorder %s28, 0
      %p137 = por %p135, %p136
      %p138 = scmp.ne.s32.totalorder %s130, %s132
      %p139 = scmp.eq.s32.totalorder %s33, 1
      %p140 = por %p138, %p139
      %p141 = scmp.ne.s32.totalorder %s132, %s133
      %p142 = scmp.eq.s32.totalorder %s33, 0
      %p143 = por %p141, %p142
      %p144 = scmp.ne.s32.totalorder %s132, %s133
      %p145 = scmp.eq.s32.totalorder %s34, 1
      %p146 = por %p144, %p145
      %p148 = scmp.ne.s32.totalorder %s133, %s147
      %p149 = scmp.eq.s32.totalorder %s34, 0
      %p150 = por %p148, %p149
      %s152 = sadd.s32 %s151, 1
      %p155 = scmp.eq.s32.totalorder %s28, 1
      %p156 = scmp.ne.s32.totalorder %s151, %s153
      %p157 = scmp.eq.s32.totalorder %s28, 0
      %p158 = por %p156, %p157
      %p159 = scmp.ne.s32.totalorder %s151, %s153
      %p160 = scmp.eq.s32.totalorder %s33, 1
      %p161 = por %p159, %p160
      %p162 = scmp.ne.s32.totalorder %s153, %s154
      %p163 = scmp.eq.s32.totalorder %s33, 0
      %p164 = por %p162, %p163
      %p165 = scmp.ne.s32.totalorder %s153, %s154
      %p166 = scmp.eq.s32.totalorder %s34, 1
      %p167 = por %p165, %p166
      %p169 = scmp.ne.s32.totalorder %s154, %s168
      %p170 = scmp.eq.s32.totalorder %s34, 0
      %p171 = por %p169, %p170
      %s173 = sadd.s32 %s172, 1
      %p176 = scmp.eq.s32.totalorder %s28, 1
      %p177 = scmp.ne.s32.totalorder %s172, %s174
      %p178 = scmp.eq.s32.totalorder %s28, 0
      %p179 = por %p177, %p178
      %p180 = scmp.ne.s32.totalorder %s172, %s174
      %p181 = scmp.eq.s32.totalorder %s33, 1
      %p182 = por %p180, %p181
      %p183 = scmp.ne.s32.totalorder %s174, %s175
      %p184 = scmp.eq.s32.totalorder %s33, 0
      %p185 = por %p183, %p184
      %p186 = scmp.ne.s32.totalorder %s174, %s175
      %p187 = scmp.eq.s32.totalorder %s34, 1
      %p188 = por %p186, %p187
      %p190 = scmp.ne.s32.totalorder %s175, %s189
      %p191 = scmp.eq.s32.totalorder %s34, 0
      %p192 = por %p190, %p191
      %s194 = sadd.s32 %s193, 1
      %p197 = scmp.eq.s32.totalorder %s28, 1
      %p198 = scmp.ne.s32.totalorder %s193, %s195
      %p199 = scmp.eq.s32.totalorder %s28, 0
      %p200 = por %p198, %p199
      %p201 = scmp.ne.s32.totalorder %s193, %s195
      %p202 = scmp.eq.s32.totalorder %s33, 1
      %p203 = por %p201, %p202
      %p204 = scmp.ne.s32.totalorder %s195, %s196
      %p205 = scmp.eq.s32.totalorder %s33, 0
      %p206 = por %p204, %p205
      %p207 = scmp.ne.s32.totalorder %s195, %s196
      %p208 = scmp.eq.s32.totalorder %s34, 1
      %p209 = por %p207, %p208
      %p211 = scmp.ne.s32.totalorder %s196, %s210
      %p212 = scmp.eq.s32.totalorder %s34, 0
      %p213 = por %p211, %p212
      %s215 = sadd.s32 %s214, 1
      %p218 = scmp.eq.s32.totalorder %s28, 1
      %p219 = scmp.ne.s32.totalorder %s214, %s216
      %p220 = scmp.eq.s32.totalorder %s28, 0
      %p221 = por %p219, %p220
      %p222 = scmp.ne.s32.totalorder %s214, %s216
      %p223 = scmp.eq.s32.totalorder %s33, 1
      %p224 = por %p222, %p223
      %p225 = scmp.ne.s32.totalorder %s216, %s217
      %p226 = scmp.eq.s32.totalorder %s33, 0
      %p227 = por %p225, %p226
      %p228 = scmp.ne.s32.totalorder %s216, %s217
      %p229 = scmp.eq.s32.totalorder %s34, 1
      %p230 = por %p228, %p229
      %p232 = scmp.ne.s32.totalorder %s217, %s231
      %p233 = scmp.eq.s32.totalorder %s34, 0
      %p234 = por %p232, %p233
      %s235 = ssub.s32 %s28, %s35
      %p236 = scmp.eq.s32.totalorder %s235, 0
      %s238 = sadd.s32 %s237, 1
      %s239 = scalar_select %p236, %s237, %s238
      %p242 = pneg %p236
      %p243 = scmp.eq.s32.totalorder %s28, 1
      %p244 = por %p242, %p243
      %p245 = scmp.ne.s32.totalorder %s237, %s240
      %p246 = scmp.eq.s32.totalorder %s28, 0
      %p247 = por %p245, %p246
      %p248 = scmp.ne.s32.totalorder %s237, %s240
      %p249 = scmp.eq.s32.totalorder %s33, 1
      %p250 = por %p248, %p249
      %p251 = scmp.ne.s32.totalorder %s240, %s241
      %p252 = scmp.eq.s32.totalorder %s33, 0
      %p253 = por %p251, %p252
      %p254 = scmp.ne.s32.totalorder %s240, %s241
      %p255 = scmp.eq.s32.totalorder %s34, 1
      %p256 = por %p254, %p255
      %p258 = scmp.ne.s32.totalorder %s241, %s257
      %p259 = scmp.eq.s32.totalorder %s34, 0
      %p260 = por %p258, %p259
      %s261 = ssub.s32 %s28, %s35
      %p262 = scmp.eq.s32.totalorder %s261, 0
      %s264 = sadd.s32 %s263, 1
      %s265 = scalar_select %p262, %s263, %s264
      %p268 = pneg %p262
      %p269 = scmp.eq.s32.totalorder %s28, 1
      %p270 = por %p268, %p269
      %p271 = scmp.ne.s32.totalorder %s263, %s266
      %p272 = scmp.eq.s32.totalorder %s28, 0
      %p273 = por %p271, %p272
      %p274 = scmp.ne.s32.totalorder %s263, %s266
      %p275 = scmp.eq.s32.totalorder %s33, 1
      %p276 = por %p274, %p275
      %p277 = scmp.ne.s32.totalorder %s266, %s267
      %p278 = scmp.eq.s32.totalorder %s33, 0
      %p279 = por %p277, %p278
      %p280 = scmp.ne.s32.totalorder %s266, %s267
      %p281 = scmp.eq.s32.totalorder %s34, 1
      %p282 = por %p280, %p281
      %p284 = scmp.ne.s32.totalorder %s267, %s283
      %p285 = scmp.eq.s32.totalorder %s34, 0
      %p286 = por %p284, %p285
      %p287 = scmp.le.s32.totalorder 1, %s28
      %p288 = scmp.lt.s32.totalorder %s28, 3
      %p289 = pnand %p287, %p288
      %p290 = pneg %p289
      // Predicated region
      $region9: #{tpu_custom_call.1} parent=5 // pred_check
        _
      $region10: #{tpu_custom_call.1} parent=5 // pred_check_branch
        %292 = sbr.rel (%p289) target = $region12
      $region11: #{tpu_custom_call.1} parent=5 // pred_region
        %s293 = ssub.s32 %s28, 1
        // Predicated region
        $region13: #{tpu_custom_call.1} parent=11 // pred_check
          %p294 = pneg %p101
        $region14: #{tpu_custom_call.1} parent=11 // pred_check_branch
          %296 = sbr.rel (%p294) target = $region16
        $region15: #{tpu_custom_call.1} parent=11 // pred_region
          %s298 = ssub.s32 3072, 3072
          %299 = vsyncadd [#allocation6], %s298
          %s300 = sshll.u32 [#allocation5], 4
          %s301 = int_to_ptr.vmem [resolvable:$true] %s300
          %306 = dma.hbm_to_vmem [thread:$0]  %s2, 3072, %s301, [#allocation6], 192, 192, 12
        $region16: #{tpu_custom_call.1} parent=11 // pred_fallthru
          _
        // Predicated region
        $region17: #{tpu_custom_call.1} parent=11 // pred_check
          %p307 = pneg %p122
        $region18: #{tpu_custom_call.1} parent=11 // pred_check_branch
          %309 = sbr.rel (%p307) target = $region20
        $region19: #{tpu_custom_call.1} parent=11 // pred_region
          _
        $region20: #{tpu_custom_call.1} parent=11 // pred_fallthru
          _
        // Predicated region
        $region21: #{tpu_custom_call.1} parent=11 // pred_check
          %p310 = pneg %p143
        $region22: #{tpu_custom_call.1} parent=11 // pred_check_branch
          %312 = sbr.rel (%p310) target = $region24
        $region23: #{tpu_custom_call.1} parent=11 // pred_region
          %s314 = ssub.s32 1024, 1024
          %315 = vsyncadd [#allocation6], %s314
          %s316 = sshll.u32 [#allocation7], 4
          %s317 = int_to_ptr.vmem [resolvable:$true] %s316
          %322 = dma.hbm_to_vmem [thread:$0]  %s4, 1024, %s317, [#allocation6], 64, 64, 4
        $region24: #{tpu_custom_call.1} parent=11 // pred_fallthru
          _
        // Predicated region
        $region25: #{tpu_custom_call.1} parent=11 // pred_check
          %p323 = pneg %p164
        $region26: #{tpu_custom_call.1} parent=11 // pred_check_branch
          %325 = sbr.rel (%p323) target = $region28
        $region27: #{tpu_custom_call.1} parent=11 // pred_region
          %s327 = ssub.s32 2048, 2048
          %328 = vsyncadd [#allocation9], %s327
          %s329 = sshll.u32 [#allocation8], 4
          %s330 = int_to_ptr.vmem [resolvable:$true] %s329
          %335 = dma.hbm_to_vmem [thread:$0]  %s5, 2048, %s330, [#allocation9], 128, 128, 8
        $region28: #{tpu_custom_call.1} parent=11 // pred_fallthru
          _
        // Predicated region
        $region29: #{tpu_custom_call.1} parent=11 // pred_check
          %p336 = pneg %p185
        $region30: #{tpu_custom_call.1} parent=11 // pred_check_branch
          %338 = sbr.rel (%p336) target = $region32
        $region31: #{tpu_custom_call.1} parent=11 // pred_region
          _
        $region32: #{tpu_custom_call.1} parent=11 // pred_fallthru
          _
        // Predicated region
        $region33: #{tpu_custom_call.1} parent=11 // pred_check
          %p339 = pneg %p206
        $region34: #{tpu_custom_call.1} parent=11 // pred_check_branch
          %341 = sbr.rel (%p339) target = $region36
        $region35: #{tpu_custom_call.1} parent=11 // pred_region
          %s343 = ssub.s32 2048, 2048
          %344 = vsyncadd [#allocation9], %s343
          %s345 = sshll.u32 [#allocation10], 4
          %s346 = int_to_ptr.vmem [resolvable:$true] %s345
          %351 = dma.hbm_to_vmem [thread:$0]  %s7, 2048, %s346, [#allocation9], 64, 64, 4
        $region36: #{tpu_custom_call.1} parent=11 // pred_fallthru
          _
        // Predicated region
        $region37: #{tpu_custom_call.1} parent=11 // pred_check
          %p352 = pneg %p227
        $region38: #{tpu_custom_call.1} parent=11 // pred_check_branch
          %354 = sbr.rel (%p352) target = $region40
        $region39: #{tpu_custom_call.1} parent=11 // pred_region
          _
        $region40: #{tpu_custom_call.1} parent=11 // pred_fallthru
          _
      $region12: #{tpu_custom_call.1} parent=5 // pred_fallthru
        _
      %p355 = scmp.lt.s32.totalorder %s28, 2
      // Predicated region
      $region41: #{tpu_custom_call.1} parent=5 // pred_check
        %p356 = pneg %p355
      $region42: #{tpu_custom_call.1} parent=5 // pred_check_branch
        %358 = sbr.rel (%p356) target = $region44
      $region43: #{tpu_custom_call.1} parent=5 // pred_region
        // Predicated region
        $region45: #{tpu_custom_call.1} parent=43 // pred_check
          %p359 = pneg %p48
        $region46: #{tpu_custom_call.1} parent=43 // pred_check_branch
          %361 = sbr.rel (%p359) target = $region48
        $region47: #{tpu_custom_call.1} parent=43 // pred_region
          %s362 = sand.u32 %s38, 1
          %s363 = scalar_lea.sflag [#allocation3], %s362
          %s364 = sand.u32 %s38, 1
          %s365 = smul.addr %s364, 8
          %s366 = scalar_lea.vmem [#allocation2], %s365
          %s368 = ssub.s32 128, 128
          %369 = vsyncadd %s363, %s368
          %s370 = smul.addr %s28, 128
          %s371 = scalar_lea.hbm %s0, %s370
          %s373 = sshll.u32 %s366, 4
          %s374 = int_to_ptr.vmem [resolvable:$true] %s373
          %376 = dma.hbm_to_vmem [thread:$0]  %s371, 128, %s374, %s363
        $region48: #{tpu_custom_call.1} parent=43 // pred_fallthru
          _
        // Predicated region
        $region49: #{tpu_custom_call.1} parent=43 // pred_check
          %p377 = pneg %p74
        $region50: #{tpu_custom_call.1} parent=43 // pred_check_branch
          %379 = sbr.rel (%p377) target = $region52
        $region51: #{tpu_custom_call.1} parent=43 // pred_region
          %p380 = scmp.lt.s32.totalorder %s28, 1
          %s381 = scalar_select %p380, %s28, 1
          %s382 = scalar_lea.vmem %s1, %s381
        $region52: #{tpu_custom_call.1} parent=43 // pred_fallthru
          _
      $region44: #{tpu_custom_call.1} parent=5 // pred_fallthru
        _
      %p383 = scmp.le.s32.totalorder 1, %s28
      %p384 = scmp.lt.s32.totalorder %s28, 3
      %p385 = pnand %p383, %p384
      %p386 = pneg %p385
      // Predicated region
      $region53: #{tpu_custom_call.1} parent=5 // pred_check
        _
      $region54: #{tpu_custom_call.1} parent=5 // pred_check_branch
        %388 = sbr.rel (%p385) target = $region56
      $region55: #{tpu_custom_call.1} parent=5 // pred_region
        %s389 = ssub.s32 %s28, 1
        %s390 = sand.u32 %s41, 1
        %s391 = scalar_lea.sflag [#allocation3], %s390
        %s392 = sand.u32 %s41, 1
        %s393 = smul.addr %s392, 8
        %s394 = scalar_lea.vmem [#allocation2], %s393
        // Predicated region
        $region57: #{tpu_custom_call.1} parent=55 // pred_check
          %p395 = pneg %p54
        $region58: #{tpu_custom_call.1} parent=55 // pred_check_branch
          %397 = sbr.rel (%p395) target = $region60
        $region59: #{tpu_custom_call.1} parent=55 // pred_region
          %398 = dma.done %s391, 128
        $region60: #{tpu_custom_call.1} parent=55 // pred_fallthru
          _
        // Predicated region
        $region61: #{tpu_custom_call.1} parent=55 // pred_check
          %p399 = pneg %p101
        $region62: #{tpu_custom_call.1} parent=55 // pred_check_branch
          %401 = sbr.rel (%p399) target = $region64
        $region63: #{tpu_custom_call.1} parent=55 // pred_region
          %402 = dma.done [#allocation6], 3072
        $region64: #{tpu_custom_call.1} parent=55 // pred_fallthru
          _
        // Predicated region
        $region65: #{tpu_custom_call.1} parent=55 // pred_check
          %p403 = pneg %p143
        $region66: #{tpu_custom_call.1} parent=55 // pred_check_branch
          %405 = sbr.rel (%p403) target = $region68
        $region67: #{tpu_custom_call.1} parent=55 // pred_region
          %406 = dma.done [#allocation6], 1024
        $region68: #{tpu_custom_call.1} parent=55 // pred_fallthru
          _
        // Predicated region
        $region69: #{tpu_custom_call.1} parent=55 // pred_check
          %p407 = pneg %p164
        $region70: #{tpu_custom_call.1} parent=55 // pred_check_branch
          %409 = sbr.rel (%p407) target = $region72
        $region71: #{tpu_custom_call.1} parent=55 // pred_region
          %410 = dma.done [#allocation9], 2048
        $region72: #{tpu_custom_call.1} parent=55 // pred_fallthru
          _
        // Predicated region
        $region73: #{tpu_custom_call.1} parent=55 // pred_check
          %p411 = pneg %p206
        $region74: #{tpu_custom_call.1} parent=55 // pred_check_branch
          %413 = sbr.rel (%p411) target = $region76
        $region75: #{tpu_custom_call.1} parent=55 // pred_region
          %414 = dma.done [#allocation9], 2048
        $region76: #{tpu_custom_call.1} parent=55 // pred_fallthru
          _
        %s415 = sand.u32 %s41, 1
        %s416 = scalar_lea.sflag [#allocation3], %s415
        %s417 = sand.u32 %s41, 1
        %s418 = smul.addr %s417, 8
        %s419 = scalar_lea.vmem [#allocation2], %s418
        %p420 = pneg %p54
        %p421 = pneg %p51
        %p422 = scmp.lt.s32.totalorder %s33, 1
        %s423 = scalar_select %p422, %s33, 1
        %s424 = scalar_lea.vmem %s1, %s423
        %p425 = pneg %p80
        %p426 = pneg %p77
        %p427 = pneg %p101
        %p428 = pneg %p98
        %p429 = pneg %p122
        %p430 = pneg %p119
        %p431 = pneg %p143
        %p432 = pneg %p140
        %p433 = pneg %p164
        %p434 = pneg %p161
        %p435 = pneg %p185
        %p436 = pneg %p182
        %p437 = pneg %p206
        %p438 = pneg %p203
        %p439 = pneg %p227
        %p440 = pneg %p224
        %p441 = pneg %p253
        %p442 = pneg %p250
        %s443 = sand.u32 %s240, 1
        %s444 = scalar_lea.sflag [#allocation4], %s443
        %s445 = sand.u32 %s240, 1
        %s446 = smul.addr %s445, 8
        %s447 = scalar_lea.vmem [#allocation11], %s446
        %p448 = pneg %p279
        %p449 = pneg %p276
        %s450 = sand.u32 %s266, 1
        %s451 = scalar_lea.sflag [#allocation13], %s450
        %s452 = sand.u32 %s266, 1
        %s453 = scalar_lea.vmem [#allocation12], %s452
        %p454 = scmp.lt.s32.totalorder %s33, 1
        %s455 = scalar_select %p454, %s33, 1
        %s456 = scalar_lea.vmem %s1, %s455
        %v458 = vld [vmem:[%s394] sm:$0xff]
        %v459 = vld [vmem:[%s456] sm:$0x1]
        %v460 = vld [vmem:[%s8] sm:$0x3f]
        %v461 = vpack.c.bf16 %v458, %v458
        %v462 = vld [vmem:[#allocation5] sm:$0xff]
        %v463 = vld [vmem:[#allocation5 + $0x8] sm:$0xf]
        %v464 = vld [vmem:[#allocation5 + $0xc] sm:$0xff]
        %v465 = vld [vmem:[#allocation5 + $0x14] sm:$0xf]
        %v466 = vld [vmem:[#allocation5 + $0x18] sm:$0xff]
        %v467 = vld [vmem:[#allocation5 + $0x20] sm:$0xf]
        %v468 = vld [vmem:[#allocation5 + $0x24] sm:$0xff]
        %v469 = vld [vmem:[#allocation5 + $0x2c] sm:$0xf]
        %v470 = vld [vmem:[#allocation5 + $0x30] sm:$0xff]
        %v471 = vld [vmem:[#allocation5 + $0x38] sm:$0xf]
        %v472 = vld [vmem:[#allocation5 + $0x3c] sm:$0xff]
        %v473 = vld [vmem:[#allocation5 + $0x44] sm:$0xf]
        %v474 = vld [vmem:[#allocation5 + $0x48] sm:$0xff]
        %v475 = vld [vmem:[#allocation5 + $0x50] sm:$0xf]
        %v476 = vld [vmem:[#allocation5 + $0x54] sm:$0xff]
        %v477 = vld [vmem:[#allocation5 + $0x5c] sm:$0xf]
        %v478 = vld [vmem:[#allocation5 + $0x60] sm:$0xff]
        %v479 = vld [vmem:[#allocation5 + $0x68] sm:$0xf]
        %v480 = vld [vmem:[#allocation5 + $0x6c] sm:$0xff]
        %v481 = vld [vmem:[#allocation5 + $0x74] sm:$0xf]
        %v482 = vld [vmem:[#allocation5 + $0x78] sm:$0xff]
        %v483 = vld [vmem:[#allocation5 + $0x80] sm:$0xf]
        %v484 = vld [vmem:[#allocation5 + $0x84] sm:$0xff]
        %v485 = vld [vmem:[#allocation5 + $0x8c] sm:$0xf]
        %v486 = vld [vmem:[#allocation5 + $0x90] sm:$0xff]
        %v487 = vld [vmem:[#allocation5 + $0x98] sm:$0xf]
        %v488 = vld [vmem:[#allocation5 + $0x9c] sm:$0xff]
        %v489 = vld [vmem:[#allocation5 + $0xa4] sm:$0xf]
        %v490 = vld [vmem:[#allocation5 + $0xa8] sm:$0xff]
        %v491 = vld [vmem:[#allocation5 + $0xb0] sm:$0xf]
        %v492 = vld [vmem:[#allocation5 + $0xb4] sm:$0xff]
        %v493 = vld [vmem:[#allocation5 + $0xbc] sm:$0xf]
        %v494 = vld [vmem:[%s3] sm:$0x7]
        %v496 = vlaneseq
        %v497 = vshrl.u32 %v496, 7
        %v498 = vsub.s32 0, %v497
        %v499 = vrot.slane %v494, %v498
        %v500 = vlaneseq
        %v501 = vshrl.u32 %v500, 7
        %v502 = vsub.s32 1, %v501
        %v503 = vrot.slane %v494, %v502
        %v504 = vlaneseq
        %v505 = vshrl.u32 %v504, 7
        %v506 = vsub.s32 2, %v505
        %v507 = vrot.slane %v494, %v506
        %v543 = vunpack.c.l.b16 %v462
        %v544 = vunpack.c.h.b16 %v462
        %v545 = vunpack.c.l.b16 %v463
        %v546 = vunpack.c.l.b16 %v464
        %v547 = vunpack.c.h.b16 %v464
        %v548 = vunpack.c.l.b16 %v465
        %v549 = vunpack.c.l.b16 %v466
        %v550 = vunpack.c.h.b16 %v466
        %v551 = vunpack.c.l.b16 %v467
        %v552 = vunpack.c.l.b16 %v468
        %v553 = vunpack.c.h.b16 %v468
        %v554 = vunpack.c.l.b16 %v469
        %v555 = vunpack.c.l.b16 %v470
        %v556 = vunpack.c.h.b16 %v470
        %v557 = vunpack.c.l.b16 %v471
        %v558 = vunpack.c.l.b16 %v472
        %v559 = vunpack.c.h.b16 %v472
        %v560 = vunpack.c.l.b16 %v473
        %v561 = vunpack.c.l.b16 %v474
        %v562 = vunpack.c.h.b16 %v474
        %v563 = vunpack.c.l.b16 %v475
        %v564 = vunpack.c.l.b16 %v476
        %v565 = vunpack.c.h.b16 %v476
        %v566 = vunpack.c.l.b16 %v477
        %v567 = vunpack.c.l.b16 %v478
        %v568 = vunpack.c.h.b16 %v478
        %v569 = vunpack.c.l.b16 %v479
        %v570 = vunpack.c.l.b16 %v480
        %v571 = vunpack.c.h.b16 %v480
        %v572 = vunpack.c.l.b16 %v481
        %v573 = vunpack.c.l.b16 %v482
        %v574 = vunpack.c.h.b16 %v482
        %v575 = vunpack.c.l.b16 %v483
        %v576 = vunpack.c.l.b16 %v484
        %v577 = vunpack.c.h.b16 %v484
        %v578 = vunpack.c.l.b16 %v485
        %v579 = vunpack.c.l.b16 %v486
        %v580 = vunpack.c.h.b16 %v486
        %v581 = vunpack.c.l.b16 %v487
        %v582 = vunpack.c.l.b16 %v488
        %v583 = vunpack.c.h.b16 %v488
        %v584 = vunpack.c.l.b16 %v489
        %v585 = vunpack.c.l.b16 %v490
        %v586 = vunpack.c.h.b16 %v490
        %v587 = vunpack.c.l.b16 %v491
        %v588 = vunpack.c.l.b16 %v492
        %v589 = vunpack.c.h.b16 %v492
        %v590 = vunpack.c.l.b16 %v493
        %v591 = vpack.c.b16 %v546, %v543
        %v592 = vpack.c.b16 %v547, %v544
        %v593 = vpack.c.b16 %v548, %v545
        %v594 = vpack.c.b16 %v552, %v549
        %v595 = vpack.c.b16 %v553, %v550
        %v596 = vpack.c.b16 %v554, %v551
        %v597 = vpack.c.b16 %v558, %v555
        %v598 = vpack.c.b16 %v559, %v556
        %v599 = vpack.c.b16 %v560, %v557
        %v600 = vpack.c.b16 %v564, %v561
        %v601 = vpack.c.b16 %v565, %v562
        %v602 = vpack.c.b16 %v566, %v563
        %v603 = vpack.c.b16 %v570, %v567
        %v604 = vpack.c.b16 %v571, %v568
        %v605 = vpack.c.b16 %v572, %v569
        %v606 = vpack.c.b16 %v576, %v573
        %v607 = vpack.c.b16 %v577, %v574
        %v608 = vpack.c.b16 %v578, %v575
        %v609 = vpack.c.b16 %v582, %v579
        %v610 = vpack.c.b16 %v583, %v580
        %v611 = vpack.c.b16 %v584, %v581
        %v612 = vpack.c.b16 %v588, %v585
        %v613 = vpack.c.b16 %v589, %v586
        %v614 = vpack.c.b16 %v590, %v587
        %639 = vmatprep.subr.bf16.mxu0 %v592
        %640 = vmatpush1.bf16.msra.mxu0 %v591
        %641 = vmatprep.subr.bf16.mxu0 %v595
        %642 = vmatpush1.bf16.msra.mxu0 %v594
        %643 = vmatprep.subr.bf16.mxu0 %v598
        %644 = vmatpush1.bf16.msra.mxu0 %v597
        %645 = vmatprep.subr.bf16.mxu0 %v601
        %646 = vmatpush1.bf16.msra.mxu0 %v600
        %647 = vmatprep.subr.bf16.mxu0 %v604
        %648 = vmatpush1.bf16.msra.mxu0 %v603
        %649 = vmatprep.subr.bf16.mxu0 %v607
        %650 = vmatpush1.bf16.msra.mxu0 %v606
        %651 = vmatprep.subr.bf16.mxu0 %v610
        %652 = vmatpush1.bf16.msra.mxu0 %v609
        %653 = vmatprep.subr.bf16.mxu0 %v613
        %654 = vmatpush1.bf16.msra.mxu0 %v612
        %655 = vmatprep.subr.bf16.mxu0 0
        %656 = vmatpush1.bf16.msra.mxu0 0
        %657 = vmatprep.subr.bf16.mxu0 0
        %658 = vmatpush1.bf16.msra.mxu0 0
        %659 = vmatprep.subr.bf16.mxu0 0
        %660 = vmatpush1.bf16.msra.mxu0 0
        %661 = vmatprep.subr.bf16.mxu0 0
        %662 = vmatpush1.bf16.msra.mxu0 0
        %663 = vmatprep.subr.bf16.mxu0 0
        %664 = vmatpush1.bf16.msra.mxu0 0
        %665 = vmatprep.subr.bf16.mxu0 0
        %666 = vmatpush1.bf16.msra.mxu0 0
        %667 = vmatprep.subr.bf16.mxu0 0
        %668 = vmatpush1.bf16.msra.mxu0 0
        %669 = vmatprep.subr.bf16.mxu0 0
        %670 = vmatpush1.bf16.msra.mxu0 0
        %671 = vmatprep.mubr.bf16.mxu0 0
        %672 = vmatmul.mubr.bf16.gmra.mrb[0].mxu0 %v461
        %v673 = vpop.f32.mrb[0].mxu0
        %v674 = vadd.f32 %v499, %v673
        %v675 = vpop.f32.mrb[0].mxu0
        %v676 = vadd.f32 %v503, %v675
        %v677 = vpop.f32.mrb[0].mxu0
        %v678 = vpop.f32.mrb[0].mxu0
        %679 = vdwg.mxu0
        %680 = vmatprep.subr.bf16.mxu0 0
        %681 = vmatpush1.bf16.msra.mxu0 %v593
        %682 = vmatprep.subr.bf16.mxu0 0
        %683 = vmatpush1.bf16.msra.mxu0 %v596
        %684 = vmatprep.subr.bf16.mxu0 0
        %685 = vmatpush1.bf16.msra.mxu0 %v599
        %686 = vmatprep.subr.bf16.mxu0 0
        %687 = vmatpush1.bf16.msra.mxu0 %v602
        %688 = vmatprep.subr.bf16.mxu0 0
        %689 = vmatpush1.bf16.msra.mxu0 %v605
        %690 = vmatprep.subr.bf16.mxu0 0
        %691 = vmatpush1.bf16.msra.mxu0 %v608
        %692 = vmatprep.subr.bf16.mxu0 0
        %693 = vmatpush1.bf16.msra.mxu0 %v611
        %694 = vmatprep.subr.bf16.mxu0 0
        %695 = vmatpush1.bf16.msra.mxu0 %v614
        %696 = vmatprep.subr.bf16.mxu0 0
        %697 = vmatpush1.bf16.msra.mxu0 0
        %698 = vmatprep.subr.bf16.mxu0 0
        %699 = vmatpush1.bf16.msra.mxu0 0
        %700 = vmatprep.subr.bf16.mxu0 0
        %701 = vmatpush1.bf16.msra.mxu0 0
        %702 = vmatprep.subr.bf16.mxu0 0
        %703 = vmatpush1.bf16.msra.mxu0 0
        %704 = vmatprep.subr.bf16.mxu0 0
        %705 = vmatpush1.bf16.msra.mxu0 0
        %706 = vmatprep.subr.bf16.mxu0 0
        %707 = vmatpush1.bf16.msra.mxu0 0
        %708 = vmatprep.subr.bf16.mxu0 0
        %709 = vmatpush1.bf16.msra.mxu0 0
        %710 = vmatprep.subr.bf16.mxu0 0
        %711 = vmatpush1.bf16.msra.mxu0 0
        %712 = vmatprep.mubr.bf16.mxu0 0
        %713 = vmatmul.mubr.bf16.gmra.mrb[0].mxu0 %v461
        %v714 = vpop.f32.mrb[0].mxu0
        %v715 = vadd.f32 %v507, %v714
        %v716 = vpop.f32.mrb[0].mxu0
        %v717 = vpop.f32.mrb[0].mxu0
        %v718 = vpop.f32.mrb[0].mxu0
        %719 = vdwg.mxu0
        %v720 = vpack.c.bf16 %v674, %v674
        %v721 = vpack.c.bf16 %v676, %v676
        %722 = vmatprep.subr.bf16.mxu0 0
        %723 = vmatpush1.bf16.xpose.msra.mxu0 %v721
        %724 = vmatprep.subr.bf16.mxu0 0
        %725 = vmatpush1.bf16.xpose.msra.mxu0 0
        %726 = vmatprep.subr.bf16.mxu0 0
        %727 = vmatpush1.bf16.xpose.msra.mxu0 0
        %728 = vmatprep.subr.bf16.mxu0 0
        %729 = vmatpush1.bf16.xpose.msra.mxu0 0
        %730 = vmatprep.subr.bf16.mxu0 0
        %731 = vmatpush1.bf16.xpose.msra.mxu0 0
        %732 = vmatprep.subr.bf16.mxu0 0
        %733 = vmatpush1.bf16.xpose.msra.mxu0 0
        %734 = vmatprep.subr.bf16.mxu0 0
        %735 = vmatpush1.bf16.xpose.msra.mxu0 0
        %736 = vmatprep.subr.bf16.mxu0 0
        %737 = vmatpush1.bf16.xpose.msra.mxu0 0
        %738 = vmatprep.subr.bf16.mxu0 0
        %739 = vmatpush1.bf16.xpose.msra.mxu0 0
        %740 = vmatprep.subr.bf16.mxu0 0
        %741 = vmatpush1.bf16.xpose.msra.mxu0 0
        %742 = vmatprep.subr.bf16.mxu0 0
        %743 = vmatpush1.bf16.xpose.msra.mxu0 0
        %744 = vmatprep.subr.bf16.mxu0 0
        %745 = vmatpush1.bf16.xpose.msra.mxu0 0
        %746 = vmatprep.subr.bf16.mxu0 0
        %747 = vmatpush1.bf16.xpose.msra.mxu0 0
        %748 = vmatprep.subr.bf16.mxu0 0
        %749 = vmatpush1.bf16.xpose.msra.mxu0 0
        %750 = vmatprep.subr.bf16.mxu0 0
        %751 = vmatpush1.bf16.xpose.msra.mxu0 0
        %752 = vmatprep.subr.bf16.mxu0 0
        %753 = vmatpush1.bf16.xpose.msra.mxu0 0
        %754 = vmatprep.mubr.bf16.mxu0 0
        %755 = vmatmul.mubr.bf16.gmra.mrb[0].mxu0 %v720
        %v756 = vpop.f32.mrb[0].mxu0
        %v757 = vadd.f32 0.0, %v756
        %v758 = vpop.f32.mrb[0].mxu0
        %v759 = vpop.f32.mrb[0].mxu0
        %v760 = vpop.f32.mrb[0].mxu0
        %761 = vdwg.mxu0
        %v762 = vmul.f32 %v757, 0.088388346
        %vm763 = vcmp.gt.f32.partialorder %v459, 0.5
        %v764 = vsel %vm763, 1, 0
        %v765 = vlaneseq
        %v766 = vshrl.u32 %v765, 7
        %v767 = vsub.s32 0, %v766
        %v768 = vrot.slane %v764, %v767
        %vm769 = vcmp.eq.s32.totalorder %v768, 1
        %v770 = vsel %vm769, %v762, -1e+09
        %vm771 = vcmask 64512
        %v772 = vsel %vm771, %v770, -inf
        %773 = vmax.xlane.f32.xlu0 %v772
        %v774 = vpop.xlane.xlu0 %773
        %v775 = vsub.f32 %v770, %v774
        %v776 = vmul.f32 %v775, 1.442695
        %v777 = vpow.pop %v776
        %v778 = vsel %vm771, %v777, 0.0
        %779 = vadd.xlane.f32.xlu0 %v778
        %v780 = vpop.xlane.xlu0 %779
        %v781 = vrcp.pop %v780
        %v782 = vmul.f32 %v777, %v781
        %v783 = vpack.c.bf16 %v782, %v782
        %v784 = vpack.c.bf16 %v715, %v715
        %v786 = vsel %vm771, %v783, 0
        %vm788 = vcmask 1043456
        %v790 = vsel %vm788, %v784, 0
        %792 = vmatprep.subr.bf16.mxu0 0
        %793 = vmatpush1.bf16.msra.mxu0 %v790
        %794 = vmatprep.subr.bf16.mxu0 0
        %795 = vmatpush1.bf16.msra.mxu0 0
        %796 = vmatprep.subr.bf16.mxu0 0
        %797 = vmatpush1.bf16.msra.mxu0 0
        %798 = vmatprep.subr.bf16.mxu0 0
        %799 = vmatpush1.bf16.msra.mxu0 0
        %800 = vmatprep.subr.bf16.mxu0 0
        %801 = vmatpush1.bf16.msra.mxu0 0
        %802 = vmatprep.subr.bf16.mxu0 0
        %803 = vmatpush1.bf16.msra.mxu0 0
        %804 = vmatprep.subr.bf16.mxu0 0
        %805 = vmatpush1.bf16.msra.mxu0 0
        %806 = vmatprep.subr.bf16.mxu0 0
        %807 = vmatpush1.bf16.msra.mxu0 0
        %808 = vmatprep.subr.bf16.mxu0 0
        %809 = vmatpush1.bf16.msra.mxu0 0
        %810 = vmatprep.subr.bf16.mxu0 0
        %811 = vmatpush1.bf16.msra.mxu0 0
        %812 = vmatprep.subr.bf16.mxu0 0
        %813 = vmatpush1.bf16.msra.mxu0 0
        %814 = vmatprep.subr.bf16.mxu0 0
        %815 = vmatpush1.bf16.msra.mxu0 0
        %816 = vmatprep.subr.bf16.mxu0 0
        %817 = vmatpush1.bf16.msra.mxu0 0
        %818 = vmatprep.subr.bf16.mxu0 0
        %819 = vmatpush1.bf16.msra.mxu0 0
        %820 = vmatprep.subr.bf16.mxu0 0
        %821 = vmatpush1.bf16.msra.mxu0 0
        %822 = vmatprep.subr.bf16.mxu0 0
        %823 = vmatpush1.bf16.msra.mxu0 0
        %824 = vmatprep.mubr.bf16.mxu0 0
        %825 = vmatmul.mubr.bf16.gmra.mrb[0].mxu0 %v786
        %v826 = vpop.f32.mrb[0].mxu0
        %v827 = vadd.f32 0.0, %v826
        %v828 = vpop.f32.mrb[0].mxu0
        %v829 = vpop.f32.mrb[0].mxu0
        %v830 = vpop.f32.mrb[0].mxu0
        %831 = vdwg.mxu0
        %v832 = vpack.c.bf16 %v827, %v827
        %v833 = vld [vmem:[#allocation7] sm:$0xf]
        %v834 = vld [vmem:[#allocation7 + $0x4] sm:$0xf]
        %v835 = vld [vmem:[#allocation7 + $0x8] sm:$0xf]
        %v836 = vld [vmem:[#allocation7 + $0xc] sm:$0xf]
        %v837 = vld [vmem:[#allocation7 + $0x10] sm:$0xf]
        %v838 = vld [vmem:[#allocation7 + $0x14] sm:$0xf]
        %v839 = vld [vmem:[#allocation7 + $0x18] sm:$0xf]
        %v840 = vld [vmem:[#allocation7 + $0x1c] sm:$0xf]
        %v841 = vld [vmem:[#allocation7 + $0x20] sm:$0xf]
        %v842 = vld [vmem:[#allocation7 + $0x24] sm:$0xf]
        %v843 = vld [vmem:[#allocation7 + $0x28] sm:$0xf]
        %v844 = vld [vmem:[#allocation7 + $0x2c] sm:$0xf]
        %v845 = vld [vmem:[#allocation7 + $0x30] sm:$0xf]
        %v846 = vld [vmem:[#allocation7 + $0x34] sm:$0xf]
        %v847 = vld [vmem:[#allocation7 + $0x38] sm:$0xf]
        %v848 = vld [vmem:[#allocation7 + $0x3c] sm:$0xf]
        %v849 = vlaneseq
        %v850 = vshrl.u32 %v849, 7
        %v851 = vsub.s32 0, %v850
        %v852 = vrot.slane %v460, %v851
        %v869 = vunpack.c.l.b16 %v833
        %v870 = vunpack.c.l.b16 %v834
        %v871 = vunpack.c.l.b16 %v835
        %v872 = vunpack.c.l.b16 %v836
        %v873 = vunpack.c.l.b16 %v837
        %v874 = vunpack.c.l.b16 %v838
        %v875 = vunpack.c.l.b16 %v839
        %v876 = vunpack.c.l.b16 %v840
        %v877 = vunpack.c.l.b16 %v841
        %v878 = vunpack.c.l.b16 %v842
        %v879 = vunpack.c.l.b16 %v843
        %v880 = vunpack.c.l.b16 %v844
        %v881 = vunpack.c.l.b16 %v845
        %v882 = vunpack.c.l.b16 %v846
        %v883 = vunpack.c.l.b16 %v847
        %v884 = vunpack.c.l.b16 %v848
        %v885 = vpack.c.b16 %v870, %v869
        %v886 = vpack.c.b16 %v872, %v871
        %v887 = vpack.c.b16 %v874, %v873
        %v888 = vpack.c.b16 %v876, %v875
        %v889 = vpack.c.b16 %v878, %v877
        %v890 = vpack.c.b16 %v880, %v879
        %v891 = vpack.c.b16 %v882, %v881
        %v892 = vpack.c.b16 %v884, %v883
        %901 = vmatprep.subr.bf16.mxu0 0
        %902 = vmatpush1.bf16.msra.mxu0 %v885
        %903 = vmatprep.subr.bf16.mxu0 0
        %904 = vmatpush1.bf16.msra.mxu0 %v886
        %905 = vmatprep.subr.bf16.mxu0 0
        %906 = vmatpush1.bf16.msra.mxu0 %v887
        %907 = vmatprep.subr.bf16.mxu0 0
        %908 = vmatpush1.bf16.msra.mxu0 %v888
        %909 = vmatprep.subr.bf16.mxu0 0
        %910 = vmatpush1.bf16.msra.mxu0 %v889
        %911 = vmatprep.subr.bf16.mxu0 0
        %912 = vmatpush1.bf16.msra.mxu0 %v890
        %913 = vmatprep.subr.bf16.mxu0 0
        %914 = vmatpush1.bf16.msra.mxu0 %v891
        %915 = vmatprep.subr.bf16.mxu0 0
        %916 = vmatpush1.bf16.msra.mxu0 %v892
        %917 = vmatprep.subr.bf16.mxu0 0
        %918 = vmatpush1.bf16.msra.mxu0 0
        %919 = vmatprep.subr.bf16.mxu0 0
        %920 = vmatpush1.bf16.msra.mxu0 0
        %921 = vmatprep.subr.bf16.mxu0 0
        %922 = vmatpush1.bf16.msra.mxu0 0
        %923 = vmatprep.subr.bf16.mxu0 0
        %924 = vmatpush1.bf16.msra.mxu0 0
        %925 = vmatprep.subr.bf16.mxu0 0
        %926 = vmatpush1.bf16.msra.mxu0 0
        %927 = vmatprep.subr.bf16.mxu0 0
        %928 = vmatpush1.bf16.msra.mxu0 0
        %929 = vmatprep.subr.bf16.mxu0 0
        %930 = vmatpush1.bf16.msra.mxu0 0
        %931 = vmatprep.subr.bf16.mxu0 0
        %932 = vmatpush1.bf16.msra.mxu0 0
        %933 = vmatprep.mubr.bf16.mxu0 0
        %934 = vmatmul.mubr.bf16.gmra.mrb[0].mxu0 %v832
        %v935 = vpop.f32.mrb[0].mxu0
        %v936 = vadd.f32 %v852, %v935
        %v937 = vpop.f32.mrb[0].mxu0
        %v938 = vpop.f32.mrb[0].mxu0
        %v939 = vpop.f32.mrb[0].mxu0
        %940 = vdwg.mxu0
        %v941 = vadd.f32 %v458, %v936
        %942 = vadd.xlane.f32.xlu0 %v941
        %v943 = vpop.xlane.xlu0 %942
        %v944 = vrcp.pop 128.0
        %v945 = vmul.f32 %v943, %v944
        %v946 = vsub.f32 %v941, %v945
        %v947 = vmul.f32 %v946, %v946
        %948 = vadd.xlane.f32.xlu0 %v947
        %v949 = vpop.xlane.xlu0 %948
        %v950 = vmul.f32 %v949, %v944
        %v951 = vadd.f32 %v950, 1e-12
        %v952 = vrsqrt.pop %v951
        %v953 = vmul.f32 %v946, %v952
        %v954 = vlaneseq
        %v955 = vshrl.u32 %v954, 7
        %v956 = vsub.s32 1, %v955
        %v957 = vrot.slane %v460, %v956
        %v958 = vmul.f32 %v953, %v957
        %v959 = vlaneseq
        %v960 = vshrl.u32 %v959, 7
        %v961 = vsub.s32 2, %v960
        %v962 = vrot.slane %v460, %v961
        %v963 = vadd.f32 %v958, %v962
        %v964 = vpack.c.bf16 %v963, %v963
        %v965 = vld [vmem:[#allocation8] sm:$0xff]
        %v966 = vld [vmem:[#allocation8 + $0x8] sm:$0xff]
        %v967 = vld [vmem:[#allocation8 + $0x10] sm:$0xff]
        %v968 = vld [vmem:[#allocation8 + $0x18] sm:$0xff]
        %v969 = vld [vmem:[#allocation8 + $0x20] sm:$0xff]
        %v970 = vld [vmem:[#allocation8 + $0x28] sm:$0xff]
        %v971 = vld [vmem:[#allocation8 + $0x30] sm:$0xff]
        %v972 = vld [vmem:[#allocation8 + $0x38] sm:$0xff]
        %v973 = vld [vmem:[#allocation8 + $0x40] sm:$0xff]
        %v974 = vld [vmem:[#allocation8 + $0x48] sm:$0xff]
        %v975 = vld [vmem:[#allocation8 + $0x50] sm:$0xff]
        %v976 = vld [vmem:[#allocation8 + $0x58] sm:$0xff]
        %v977 = vld [vmem:[#allocation8 + $0x60] sm:$0xff]
        %v978 = vld [vmem:[#allocation8 + $0x68] sm:$0xff]
        %v979 = vld [vmem:[#allocation8 + $0x70] sm:$0xff]
        %v980 = vld [vmem:[#allocation8 + $0x78] sm:$0xff]
        %v981 = vld [vmem:[%s6] sm:$0x3]
        %v983 = vlaneseq
        %v984 = vshrl.u32 %v983, 7
        %v985 = vsub.s32 0, %v984
        %v986 = vrot.slane %v981, %v985
        %v987 = vlaneseq
        %v988 = vshrl.u32 %v987, 7
        %v989 = vsub.s32 1, %v988
        %v990 = vrot.slane %v981, %v989
        %v1009 = vunpack.c.l.b16 %v965
        %v1010 = vunpack.c.h.b16 %v965
        %v1011 = vunpack.c.l.b16 %v966
        %v1012 = vunpack.c.h.b16 %v966
        %v1013 = vunpack.c.l.b16 %v967
        %v1014 = vunpack.c.h.b16 %v967
        %v1015 = vunpack.c.l.b16 %v968
        %v1016 = vunpack.c.h.b16 %v968
        %v1017 = vunpack.c.l.b16 %v969
        %v1018 = vunpack.c.h.b16 %v969
        %v1019 = vunpack.c.l.b16 %v970
        %v1020 = vunpack.c.h.b16 %v970
        %v1021 = vunpack.c.l.b16 %v971
        %v1022 = vunpack.c.h.b16 %v971
        %v1023 = vunpack.c.l.b16 %v972
        %v1024 = vunpack.c.h.b16 %v972
        %v1025 = vunpack.c.l.b16 %v973
        %v1026 = vunpack.c.h.b16 %v973
        %v1027 = vunpack.c.l.b16 %v974
        %v1028 = vunpack.c.h.b16 %v974
        %v1029 = vunpack.c.l.b16 %v975
        %v1030 = vunpack.c.h.b16 %v975
        %v1031 = vunpack.c.l.b16 %v976
        %v1032 = vunpack.c.h.b16 %v976
        %v1033 = vunpack.c.l.b16 %v977
        %v1034 = vunpack.c.h.b16 %v977
        %v1035 = vunpack.c.l.b16 %v978
        %v1036 = vunpack.c.h.b16 %v978
        %v1037 = vunpack.c.l.b16 %v979
        %v1038 = vunpack.c.h.b16 %v979
        %v1039 = vunpack.c.l.b16 %v980
        %v1040 = vunpack.c.h.b16 %v980
        %v1041 = vpack.c.b16 %v1011, %v1009
        %v1042 = vpack.c.b16 %v1012, %v1010
        %v1043 = vpack.c.b16 %v1015, %v1013
        %v1044 = vpack.c.b16 %v1016, %v1014
        %v1045 = vpack.c.b16 %v1019, %v1017
        %v1046 = vpack.c.b16 %v1020, %v1018
        %v1047 = vpack.c.b16 %v1023, %v1021
        %v1048 = vpack.c.b16 %v1024, %v1022
        %v1049 = vpack.c.b16 %v1027, %v1025
        %v1050 = vpack.c.b16 %v1028, %v1026
        %v1051 = vpack.c.b16 %v1031, %v1029
        %v1052 = vpack.c.b16 %v1032, %v1030
        %v1053 = vpack.c.b16 %v1035, %v1033
        %v1054 = vpack.c.b16 %v1036, %v1034
        %v1055 = vpack.c.b16 %v1039, %v1037
        %v1056 = vpack.c.b16 %v1040, %v1038
        %1073 = vmatprep.subr.bf16.mxu0 %v1042
        %1074 = vmatpush1.bf16.msra.mxu0 %v1041
        %1075 = vmatprep.subr.bf16.mxu0 %v1044
        %1076 = vmatpush1.bf16.msra.mxu0 %v1043
        %1077 = vmatprep.subr.bf16.mxu0 %v1046
        %1078 = vmatpush1.bf16.msra.mxu0 %v1045
        %1079 = vmatprep.subr.bf16.mxu0 %v1048
        %1080 = vmatpush1.bf16.msra.mxu0 %v1047
        %1081 = vmatprep.subr.bf16.mxu0 %v1050
        %1082 = vmatpush1.bf16.msra.mxu0 %v1049
        %1083 = vmatprep.subr.bf16.mxu0 %v1052
        %1084 = vmatpush1.bf16.msra.mxu0 %v1051
        %1085 = vmatprep.subr.bf16.mxu0 %v1054
        %1086 = vmatpush1.bf16.msra.mxu0 %v1053
        %1087 = vmatprep.subr.bf16.mxu0 %v1056
        %1088 = vmatpush1.bf16.msra.mxu0 %v1055
        %1089 = vmatprep.subr.bf16.mxu0 0
        %1090 = vmatpush1.bf16.msra.mxu0 0
        %1091 = vmatprep.subr.bf16.mxu0 0
        %1092 = vmatpush1.bf16.msra.mxu0 0
        %1093 = vmatprep.subr.bf16.mxu0 0
        %1094 = vmatpush1.bf16.msra.mxu0 0
        %1095 = vmatprep.subr.bf16.mxu0 0
        %1096 = vmatpush1.bf16.msra.mxu0 0
        %1097 = vmatprep.subr.bf16.mxu0 0
        %1098 = vmatpush1.bf16.msra.mxu0 0
        %1099 = vmatprep.subr.bf16.mxu0 0
        %1100 = vmatpush1.bf16.msra.mxu0 0
        %1101 = vmatprep.subr.bf16.mxu0 0
        %1102 = vmatpush1.bf16.msra.mxu0 0
        %1103 = vmatprep.subr.bf16.mxu0 0
        %1104 = vmatpush1.bf16.msra.mxu0 0
        %1105 = vmatprep.mubr.bf16.mxu0 0
        %1106 = vmatmul.mubr.bf16.gmra.mrb[0].mxu0 %v964
        %v1107 = vpop.f32.mrb[0].mxu0
        %v1108 = vadd.f32 %v986, %v1107
        %v1109 = vpop.f32.mrb[0].mxu0
        %v1110 = vadd.f32 %v990, %v1109
        %v1111 = vpop.f32.mrb[0].mxu0
        %v1112 = vpop.f32.mrb[0].mxu0
        %1113 = vdwg.mxu0
        %v1114 = vmul.f32 %v1108, %v1108
        %v1115 = vmul.f32 %v1110, %v1110
        %v1116 = vmul.f32 %v1108, %v1114
        %v1117 = vmul.f32 %v1110, %v1115
        %v1118 = vmul.f32 %v1116, 0.044715
        %v1119 = vmul.f32 %v1117, 0.044715
        %v1120 = vadd.f32 %v1108, %v1118
        %v1121 = vadd.f32 %v1110, %v1119
        %v1122 = vmul.f32 %v1120, 0.7978846
        %v1123 = vmul.f32 %v1121, 0.7978846
        %v1124 = vtanh.pop %v1122
        %v1125 = vtanh.pop %v1123
        %v1126 = vadd.f32 %v1124, 1.0
        %v1127 = vadd.f32 %v1125, 1.0
        %v1128 = vmul.f32 %v1126, 0.5
        %v1129 = vmul.f32 %v1127, 0.5
        %v1130 = vmul.f32 %v1108, %v1128
        %v1131 = vmul.f32 %v1110, %v1129
        %v1132 = vpack.c.bf16 %v1130, %v1130
        %v1133 = vpack.c.bf16 %v1131, %v1131
        %v1134 = vld [vmem:[#allocation10] sm:$0xf]
        %v1135 = vld [vmem:[#allocation10 + $0x4] sm:$0xf]
        %v1136 = vld [vmem:[#allocation10 + $0x8] sm:$0xf]
        %v1137 = vld [vmem:[#allocation10 + $0xc] sm:$0xf]
        %v1138 = vld [vmem:[#allocation10 + $0x10] sm:$0xf]
        %v1139 = vld [vmem:[#allocation10 + $0x14] sm:$0xf]
        %v1140 = vld [vmem:[#allocation10 + $0x18] sm:$0xf]
        %v1141 = vld [vmem:[#allocation10 + $0x1c] sm:$0xf]
        %v1142 = vld [vmem:[#allocation10 + $0x20] sm:$0xf]
        %v1143 = vld [vmem:[#allocation10 + $0x24] sm:$0xf]
        %v1144 = vld [vmem:[#allocation10 + $0x28] sm:$0xf]
        %v1145 = vld [vmem:[#allocation10 + $0x2c] sm:$0xf]
        %v1146 = vld [vmem:[#allocation10 + $0x30] sm:$0xf]
        %v1147 = vld [vmem:[#allocation10 + $0x34] sm:$0xf]
        %v1148 = vld [vmem:[#allocation10 + $0x38] sm:$0xf]
        %v1149 = vld [vmem:[#allocation10 + $0x3c] sm:$0xf]
        %v1150 = vld [vmem:[#allocation10 + $0x40] sm:$0xf]
        %v1151 = vld [vmem:[#allocation10 + $0x44] sm:$0xf]
        %v1152 = vld [vmem:[#allocation10 + $0x48] sm:$0xf]
        %v1153 = vld [vmem:[#allocation10 + $0x4c] sm:$0xf]
        %v1154 = vld [vmem:[#allocation10 + $0x50] sm:$0xf]
        %v1155 = vld [vmem:[#allocation10 + $0x54] sm:$0xf]
        %v1156 = vld [vmem:[#allocation10 + $0x58] sm:$0xf]
        %v1157 = vld [vmem:[#allocation10 + $0x5c] sm:$0xf]
        %v1158 = vld [vmem:[#allocation10 + $0x60] sm:$0xf]
        %v1159 = vld [vmem:[#allocation10 + $0x64] sm:$0xf]
        %v1160 = vld [vmem:[#allocation10 + $0x68] sm:$0xf]
        %v1161 = vld [vmem:[#allocation10 + $0x6c] sm:$0xf]
        %v1162 = vld [vmem:[#allocation10 + $0x70] sm:$0xf]
        %v1163 = vld [vmem:[#allocation10 + $0x74] sm:$0xf]
        %v1164 = vld [vmem:[#allocation10 + $0x78] sm:$0xf]
        %v1165 = vld [vmem:[#allocation10 + $0x7c] sm:$0xf]
        %v1166 = vlaneseq
        %v1167 = vshrl.u32 %v1166, 7
        %v1168 = vsub.s32 3, %v1167
        %v1169 = vrot.slane %v460, %v1168
        %v1202 = vunpack.c.l.b16 %v1134
        %v1203 = vunpack.c.l.b16 %v1135
        %v1204 = vunpack.c.l.b16 %v1136
        %v1205 = vunpack.c.l.b16 %v1137
        %v1206 = vunpack.c.l.b16 %v1138
        %v1207 = vunpack.c.l.b16 %v1139
        %v1208 = vunpack.c.l.b16 %v1140
        %v1209 = vunpack.c.l.b16 %v1141
        %v1210 = vunpack.c.l.b16 %v1142
        %v1211 = vunpack.c.l.b16 %v1143
        %v1212 = vunpack.c.l.b16 %v1144
        %v1213 = vunpack.c.l.b16 %v1145
        %v1214 = vunpack.c.l.b16 %v1146
        %v1215 = vunpack.c.l.b16 %v1147
        %v1216 = vunpack.c.l.b16 %v1148
        %v1217 = vunpack.c.l.b16 %v1149
        %v1218 = vunpack.c.l.b16 %v1150
        %v1219 = vunpack.c.l.b16 %v1151
        %v1220 = vunpack.c.l.b16 %v1152
        %v1221 = vunpack.c.l.b16 %v1153
        %v1222 = vunpack.c.l.b16 %v1154
        %v1223 = vunpack.c.l.b16 %v1155
        %v1224 = vunpack.c.l.b16 %v1156
        %v1225 = vunpack.c.l.b16 %v1157
        %v1226 = vunpack.c.l.b16 %v1158
        %v1227 = vunpack.c.l.b16 %v1159
        %v1228 = vunpack.c.l.b16 %v1160
        %v1229 = vunpack.c.l.b16 %v1161
        %v1230 = vunpack.c.l.b16 %v1162
        %v1231 = vunpack.c.l.b16 %v1163
        %v1232 = vunpack.c.l.b16 %v1164
        %v1233 = vunpack.c.l.b16 %v1165
        %v1234 = vpack.c.b16 %v1203, %v1202
        %v1235 = vpack.c.b16 %v1205, %v1204
        %v1236 = vpack.c.b16 %v1207, %v1206
        %v1237 = vpack.c.b16 %v1209, %v1208
        %v1238 = vpack.c.b16 %v1211, %v1210
        %v1239 = vpack.c.b16 %v1213, %v1212
        %v1240 = vpack.c.b16 %v1215, %v1214
        %v1241 = vpack.c.b16 %v1217, %v1216
        %v1242 = vpack.c.b16 %v1219, %v1218
        %v1243 = vpack.c.b16 %v1221, %v1220
        %v1244 = vpack.c.b16 %v1223, %v1222
        %v1245 = vpack.c.b16 %v1225, %v1224
        %v1246 = vpack.c.b16 %v1227, %v1226
        %v1247 = vpack.c.b16 %v1229, %v1228
        %v1248 = vpack.c.b16 %v1231, %v1230
        %v1249 = vpack.c.b16 %v1233, %v1232
        %1266 = vmatprep.subr.bf16.mxu0 0
        %1267 = vmatpush1.bf16.msra.mxu0 %v1234
        %1268 = vmatprep.subr.bf16.mxu0 0
        %1269 = vmatpush1.bf16.msra.mxu0 %v1235
        %1270 = vmatprep.subr.bf16.mxu0 0
        %1271 = vmatpush1.bf16.msra.mxu0 %v1236
        %1272 = vmatprep.subr.bf16.mxu0 0
        %1273 = vmatpush1.bf16.msra.mxu0 %v1237
        %1274 = vmatprep.subr.bf16.mxu0 0
        %1275 = vmatpush1.bf16.msra.mxu0 %v1238
        %1276 = vmatprep.subr.bf16.mxu0 0
        %1277 = vmatpush1.bf16.msra.mxu0 %v1239
        %1278 = vmatprep.subr.bf16.mxu0 0
        %1279 = vmatpush1.bf16.msra.mxu0 %v1240
        %1280 = vmatprep.subr.bf16.mxu0 0
        %1281 = vmatpush1.bf16.msra.mxu0 %v1241
        %1282 = vmatprep.subr.bf16.mxu0 0
        %1283 = vmatpush1.bf16.msra.mxu0 %v1242
        %1284 = vmatprep.subr.bf16.mxu0 0
        %1285 = vmatpush1.bf16.msra.mxu0 %v1243
        %1286 = vmatprep.subr.bf16.mxu0 0
        %1287 = vmatpush1.bf16.msra.mxu0 %v1244
        %1288 = vmatprep.subr.bf16.mxu0 0
        %1289 = vmatpush1.bf16.msra.mxu0 %v1245
        %1290 = vmatprep.subr.bf16.mxu0 0
        %1291 = vmatpush1.bf16.msra.mxu0 %v1246
        %1292 = vmatprep.subr.bf16.mxu0 0
        %1293 = vmatpush1.bf16.msra.mxu0 %v1247
        %1294 = vmatprep.subr.bf16.mxu0 0
        %1295 = vmatpush1.bf16.msra.mxu0 %v1248
        %1296 = vmatprep.subr.bf16.mxu0 0
        %1297 = vmatpush1.bf16.msra.mxu0 %v1249
        %1298 = vmatprep.mubr.bf16.mxu0 %v1133
        %1299 = vmatmul.mubr.bf16.gmra.mrb[0].mxu0 %v1132
        %v1300 = vpop.f32.mrb[0].mxu0
        %v1301 = vadd.f32 %v1169, %v1300
        %v1302 = vpop.f32.mrb[0].mxu0
        %v1303 = vpop.f32.mrb[0].mxu0
        %v1304 = vpop.f32.mrb[0].mxu0
        %1305 = vdwg.mxu0
        %v1306 = vadd.f32 %v963, %v1301
        %1307 = vadd.xlane.f32.xlu0 %v1306
        %v1308 = vpop.xlane.xlu0 %1307
        %v1309 = vmul.f32 %v1308, %v944
        %v1310 = vsub.f32 %v1306, %v1309
        %v1311 = vmul.f32 %v1310, %v1310
        %1312 = vadd.xlane.f32.xlu0 %v1311
        %v1313 = vpop.xlane.xlu0 %1312
        %v1314 = vmul.f32 %v1313, %v944
        %v1315 = vadd.f32 %v1314, 1e-12
        %v1316 = vrsqrt.pop %v1315
        %v1317 = vmul.f32 %v1310, %v1316
        %v1318 = vlaneseq
        %v1319 = vshrl.u32 %v1318, 7
        %v1320 = vsub.s32 4, %v1319
        %v1321 = vrot.slane %v460, %v1320
        %v1322 = vmul.f32 %v1317, %v1321
        %v1323 = vlaneseq
        %v1324 = vshrl.u32 %v1323, 7
        %v1325 = vsub.s32 5, %v1324
        %v1326 = vrot.slane %v460, %v1325
        %v1327 = vadd.f32 %v1322, %v1326
        %1328 = vst [vmem:[%s447] sm:$0xff] %v1327
        %v1330 = vsel %vm771, %v459, 0
        %1332 = vmatprep.subr.mxu0 0.0
        %1333 = vmatpush1.msra.mxu0 %v1327
        %1334 = vmatprep.subr.mxu0 0.0
        %1335 = vmatpush1.msra.mxu0 0.0
        %1336 = vmatprep.subr.mxu0 0.0
        %1337 = vmatpush1.msra.mxu0 0.0
        %1338 = vmatprep.subr.mxu0 0.0
        %1339 = vmatpush1.msra.mxu0 0.0
        %1340 = vmatprep.subr.mxu0 0.0
        %1341 = vmatpush1.msra.mxu0 0.0
        %1342 = vmatprep.subr.mxu0 0.0
        %1343 = vmatpush1.msra.mxu0 0.0
        %1344 = vmatprep.subr.mxu0 0.0
        %1345 = vmatpush1.msra.mxu0 0.0
        %1346 = vmatprep.subr.mxu0 0.0
        %1347 = vmatpush1.msra.mxu0 0.0
        %1348 = vmatprep.subr.mxu0 0.0
        %1349 = vmatpush1.msra.mxu0 0.0
        %1350 = vmatprep.subr.mxu0 0.0
        %1351 = vmatpush1.msra.mxu0 0.0
        %1352 = vmatprep.subr.mxu0 0.0
        %1353 = vmatpush1.msra.mxu0 0.0
        %1354 = vmatprep.subr.mxu0 0.0
        %1355 = vmatpush1.msra.mxu0 0.0
        %1356 = vmatprep.subr.mxu0 0.0
        %1357 = vmatpush1.msra.mxu0 0.0
        %1358 = vmatprep.subr.mxu0 0.0
        %1359 = vmatpush1.msra.mxu0 0.0
        %1360 = vmatprep.subr.mxu0 0.0
        %1361 = vmatpush1.msra.mxu0 0.0
        %1362 = vmatprep.subr.mxu0 0.0
        %1363 = vmatpush1.msra.mxu0 0.0
        %1364 = vmatprep.subr.mxu0 0.0
        %1365 = vmatpush1.msra.mxu0 0.0
        %1366 = vmatprep.subr.mxu0 0.0
        %1367 = vmatpush1.msra.mxu0 0.0
        %1368 = vmatprep.subr.mxu0 0.0
        %1369 = vmatpush1.msra.mxu0 0.0
        %1370 = vmatprep.subr.mxu0 0.0
        %1371 = vmatpush1.msra.mxu0 0.0
        %1372 = vmatprep.subr.mxu0 0.0
        %1373 = vmatpush1.msra.mxu0 0.0
        %1374 = vmatprep.subr.mxu0 0.0
        %1375 = vmatpush1.msra.mxu0 0.0
        %1376 = vmatprep.subr.mxu0 0.0
        %1377 = vmatpush1.msra.mxu0 0.0
        %1378 = vmatprep.subr.mxu0 0.0
        %1379 = vmatpush1.msra.mxu0 0.0
        %1380 = vmatprep.subr.mxu0 0.0
        %1381 = vmatpush1.msra.mxu0 0.0
        %1382 = vmatprep.subr.mxu0 0.0
        %1383 = vmatpush1.msra.mxu0 0.0
        %1384 = vmatprep.subr.mxu0 0.0
        %1385 = vmatpush1.msra.mxu0 0.0
        %1386 = vmatprep.subr.mxu0 0.0
        %1387 = vmatpush1.msra.mxu0 0.0
        %1388 = vmatprep.subr.mxu0 0.0
        %1389 = vmatpush1.msra.mxu0 0.0
        %1390 = vmatprep.subr.mxu0 0.0
        %1391 = vmatpush1.msra.mxu0 0.0
        %1392 = vmatprep.subr.mxu0 0.0
        %1393 = vmatpush1.msra.mxu0 0.0
        %1394 = vmatprep.subr.mxu0 0.0
        %1395 = vmatpush1.msra.mxu0 0.0
        %1396 = vmatprep.mubr.f32.mxu0 0.0
        %1397 = vmatmul.mubr.f32.gmra.mrb[0].mxu0 %v1330
        %v1398 = vpop.f32.mrb[0].mxu0
        %v1399 = vadd.f32 0.0, %v1398
        %v1400 = vpop.f32.mrb[0].mxu0
        %1401 = vdwg.mxu0
        %vm1402 = vcmask 57344
        %v1403 = vsel %vm1402, %v459, 0.0
        %1404 = vadd.xlane.f32.xlu0 %v1403
        %v1405 = vpop.xlane.xlu0 %1404
        %v1406 = vmax.f32 %v1405, 1e-09
        %v1407 = vrcp.pop %v1406
        %v1408 = vmul.f32 %v1399, %v1407
        %v1409 = vmul.f32 %v1408, %v1408
        %vm1410 = vcmask 1040384
        %v1411 = vsel %vm1410, %v1409, 0.0
        %1412 = vadd.xlane.f32.xlu0 %v1411
        %v1413 = vpop.xlane.xlu0 %1412
        %v1414 = vmax.f32 %v1413, 1e-24
        %v1415 = vrsqrt.pop %v1414
        %v1416 = vmul.f32 %v1408, %v1415
        %1417 = vst [vmem:[%s453] sm:$0x1] %v1416
        %s1418 = sand.u32 %s240, 1
        %s1419 = scalar_lea.sflag [#allocation4], %s1418
        %s1420 = sand.u32 %s240, 1
        %s1421 = smul.addr %s1420, 8
        %s1422 = scalar_lea.vmem [#allocation11], %s1421
        %s1423 = sand.u32 %s266, 1
        %s1424 = scalar_lea.sflag [#allocation13], %s1423
        %s1425 = sand.u32 %s266, 1
        %s1426 = scalar_lea.vmem [#allocation12], %s1425
        // Predicated region
        $region77: #{tpu_custom_call.1} parent=55 // pred_check
          %p1427 = pneg %p250
        $region78: #{tpu_custom_call.1} parent=55 // pred_check_branch
          %1429 = sbr.rel (%p1427) target = $region80
        $region79: #{tpu_custom_call.1} parent=55 // pred_region
          %s1431 = ssub.s32 128, 128
          %1432 = vsyncadd %s1419, %s1431
          %s1433 = smul.addr %s33, 128
          %s1434 = scalar_lea.hbm %s9, %s1433
          %s1436 = sshll.u32 %s1422, 4
          %s1437 = int_to_ptr.vmem [resolvable:$true] %s1436
          %1439 = dma.vmem_to_hbm [thread:$0]  %s1437, 128, %s1434, %s1419
        $region80: #{tpu_custom_call.1} parent=55 // pred_fallthru
          _
        // Predicated region
        $region81: #{tpu_custom_call.1} parent=55 // pred_check
          %p1440 = pneg %p276
        $region82: #{tpu_custom_call.1} parent=55 // pred_check_branch
          %1442 = sbr.rel (%p1440) target = $region84
        $region83: #{tpu_custom_call.1} parent=55 // pred_region
          %s1444 = ssub.s32 16, 16
          %1445 = vsyncadd %s1424, %s1444
          %s1446 = smul.addr %s33, 16
          %s1447 = scalar_lea.hbm %s10, %s1446
          %s1449 = sshll.u32 %s1426, 4
          %s1450 = int_to_ptr.vmem [resolvable:$true] %s1449
          %1452 = dma.vmem_to_hbm [thread:$0]  %s1450, 16, %s1447, %s1424
        $region84: #{tpu_custom_call.1} parent=55 // pred_fallthru
          _
      $region56: #{tpu_custom_call.1} parent=5 // pred_fallthru
        _
      %p1453 = scmp.le.s32.totalorder 2, %s28
      // Predicated region
      $region85: #{tpu_custom_call.1} parent=5 // pred_check
        %p1454 = pneg %p1453
      $region86: #{tpu_custom_call.1} parent=5 // pred_check_branch
        %1456 = sbr.rel (%p1454) target = $region88
      $region87: #{tpu_custom_call.1} parent=5 // pred_region
        %s1457 = ssub.s32 %s28, 2
        // Predicated region
        $region89: #{tpu_custom_call.1} parent=87 // pred_check
          %p1458 = pneg %p256
        $region90: #{tpu_custom_call.1} parent=87 // pred_check_branch
          %1460 = sbr.rel (%p1458) target = $region92
        $region91: #{tpu_custom_call.1} parent=87 // pred_region
          %s1461 = sand.u32 %s241, 1
          %s1462 = scalar_lea.sflag [#allocation4], %s1461
          %s1463 = sand.u32 %s241, 1
          %s1464 = smul.addr %s1463, 8
          %s1465 = scalar_lea.vmem [#allocation11], %s1464
          %1466 = dma.done %s1462, 128
        $region92: #{tpu_custom_call.1} parent=87 // pred_fallthru
          _
        // Predicated region
        $region93: #{tpu_custom_call.1} parent=87 // pred_check
          %p1467 = pneg %p282
        $region94: #{tpu_custom_call.1} parent=87 // pred_check_branch
          %1469 = sbr.rel (%p1467) target = $region96
        $region95: #{tpu_custom_call.1} parent=87 // pred_region
          %s1470 = sand.u32 %s267, 1
          %s1471 = scalar_lea.sflag [#allocation13], %s1470
          %s1472 = sand.u32 %s267, 1
          %s1473 = scalar_lea.vmem [#allocation12], %s1472
          %1474 = dma.done %s1471, 16
        $region96: #{tpu_custom_call.1} parent=87 // pred_fallthru
          _
      $region88: #{tpu_custom_call.1} parent=5 // pred_fallthru
        _
    $region6: #{tpu_custom_call.1} parent=1 // loop_footer
      %s32 = sadd.s32 1, %s28
    $region7: #{tpu_custom_call.1} parent=1 // loop_footer_branch
      %27 = sbr.rel target = $region3
    $region8: #{tpu_custom_call.1} parent=1 // loop_exit
      _
    %1475 = vsyncpa [#allocation3], 1
    %s1476 = scalar_lea.sflag [#allocation3], 1
    %1477 = vsyncpa %s1476, 1
    %1478 = vsyncpa [#allocation6], 1
    %1479 = vsyncpa [#allocation9], 1
    %1480 = vsyncpa [#allocation4], 1
    %s1481 = scalar_lea.sflag [#allocation4], 1
    %1482 = vsyncpa %s1481, 1
    %1483 = vsyncpa [#allocation13], 1
    %s1484 = scalar_lea.sflag [#allocation13], 1
    %1485 = vsyncpa %s1484, 1

</llo_original>
